<compile_context>
chip_gen: v7x
topology: tpu7x:2x2x1
jax: 0.10.0
libtpu: 0.0.40
codegen_flags: <defaults>
</compile_context>

<pallas_src>
import jax
import jax.numpy as jnp
from jax.experimental import pallas as pl
from jax.experimental.pallas import tpu as pltpu

EMBED_DIM = 32
NUM_HEADS = 4
HEAD_DIM = EMBED_DIM // NUM_HEADS
NUM_LAYERS = 3
FF_HIDDEN = 128
NUM_CLASSES = 7
PADDED_CLASSES = 128
LN_EPS = 1e-5
BN_EPS = 1e-5
LANES = 128


def _layer_norm(x, g, b):
    mu = jnp.mean(x, axis=-1, keepdims=True)
    var = jnp.mean(jnp.square(x - mu), axis=-1, keepdims=True)
    return (x - mu) * jax.lax.rsqrt(var + LN_EPS) * g + b


def tab_transformer_kernel(x_num_ref, cat_ref, layers_ref, head_ref, out_ref):
    B = x_num_ref.shape[0]
    N = B + cat_ref.shape[0]            # B * S tokens, token-major rows s*B + b
    S = N // B
    E, H, D = EMBED_DIM, NUM_HEADS, HEAD_DIM
    FF, HALF = FF_HIDDEN, FF_HIDDEN // 2
    scale = 1.0 / (float(D) ** 0.5)

    # ---- static row offsets inside the two parameter slabs ----
    # layer slab rows: [0:E] wqkv | [E:E+8] bias/LN rows | [E+8:2E+8] wo
    #                  | [2E+8:3E+8] w1 | [3E+8:3E+8+FF] w2
    lv = E
    # head slab rows:  [0:S*E] h1w | [S*E:S*E+8] bias rows | [+FF] h2w
    #                  | [+HALF] h3w | [+np_k] np_w
    hv = S * E
    h2w_off = hv + 8
    h3w_off = h2w_off + FF
    np_off = h3w_off + HALF
    np_k = x_num_ref.shape[1]

    # Numerical-projection token (s = 0) for all batches at once: (B, E).
    np_w = head_ref[np_off:np_off + np_k, 0:E]
    np_b = head_ref[hv + 7:hv + 8, 0:E]
    num_tok = jnp.dot(x_num_ref[...], np_w,
                      preferred_element_type=jnp.float32) + np_b

    # Token matrix (N, E): [numerical tokens ; categorical tokens], token-major.
    x0 = jnp.concatenate([num_tok, cat_ref[...]], axis=0)

    # Block-diagonal additive mask built in-kernel from iotas (no (N,N) DMA).
    row_b = jax.lax.broadcasted_iota(jnp.int32, (N, N), 0) % B
    col_b = jax.lax.broadcasted_iota(jnp.int32, (N, N), 1) % B
    mask = jnp.where(row_b == col_b, 0.0, -1e9).astype(jnp.float32)

    def layer(l, x):
        # Per-layer weight views (static slices at dynamic layer index l).
        wqkv = layers_ref[l, 0:E, 0:3 * E]                     # (E, 3E)
        wo = layers_ref[l, E + 8:2 * E + 8, 0:E]               # (E, E)
        w1 = layers_ref[l, 2 * E + 8:3 * E + 8, :]             # (E, FF)
        w2 = layers_ref[l, 3 * E + 8:3 * E + 8 + FF, 0:E]      # (FF, E)
        bqkv = layers_ref[l, lv + 0:lv + 1, 0:3 * E]
        bo = layers_ref[l, lv + 1:lv + 2, 0:E]
        ln1_g = layers_ref[l, lv + 2:lv + 3, 0:E]
        ln1_b = layers_ref[l, lv + 3:lv + 4, 0:E]
        b1 = layers_ref[l, lv + 4:lv + 5, :]
        b2 = layers_ref[l, lv + 5:lv + 6, 0:E]
        ln2_g = layers_ref[l, lv + 6:lv + 7, 0:E]
        ln2_b = layers_ref[l, lv + 7:lv + 8, 0:E]

        # Fused QKV: one lane-dense matmul for all heads & batches.
        qkv = jnp.dot(x, wqkv, preferred_element_type=jnp.float32) + bqkv  # (N, 3E)

        # Per-head attention on 8-lane slices; block-diagonal mask keeps
        # attention within-batch.
        ctx_heads = []
        for h in range(H):
            q = qkv[:, h * D:(h + 1) * D]
            k = qkv[:, E + h * D:E + (h + 1) * D]
            v = qkv[:, 2 * E + h * D:2 * E + (h + 1) * D]
            sc = jnp.einsum('nd,md->nm', q, k,
                            preferred_element_type=jnp.float32) * scale + mask
            sc = sc - jnp.max(sc, axis=-1, keepdims=True)
            p = jnp.exp(sc)
            p = p * pl.reciprocal(jnp.sum(p, axis=-1, keepdims=True), approx=True)
            ctx_heads.append(jnp.dot(p, v, preferred_element_type=jnp.float32))
        ctx = jnp.concatenate(ctx_heads, axis=-1)              # (N, E), torch order

        # Single out-projection (N, E) @ (E, E).
        attn = jnp.dot(ctx, wo, preferred_element_type=jnp.float32) + bo
        x = _layer_norm(x + attn, ln1_g, ln1_b)
        ff = jnp.maximum(jnp.dot(x, w1, preferred_element_type=jnp.float32) + b1, 0.0)
        ff = jnp.dot(ff, w2, preferred_element_type=jnp.float32) + b2
        return _layer_norm(x + ff, ln2_g, ln2_b)

    x = jax.lax.fori_loop(0, NUM_LAYERS, layer, x0)

    # MLP head.  flat[b, s*E:(s+1)*E] = token s of batch b  ->  one lane-dense
    # (B, S*E) @ (S*E, FF) matmul against the host-stacked h1w.
    flat = jnp.concatenate([x[s * B:(s + 1) * B, :] for s in range(S)], axis=-1)

    h1w = head_ref[0:S * E, :]                                 # (S*E, FF)
    h1b = head_ref[hv + 0:hv + 1, :]
    bn1_s = head_ref[hv + 1:hv + 2, :]
    bn1_sh = head_ref[hv + 2:hv + 3, :]
    h2b = head_ref[hv + 3:hv + 4, 0:HALF]
    bn2_s = head_ref[hv + 4:hv + 5, 0:HALF]
    bn2_sh = head_ref[hv + 5:hv + 6, 0:HALF]
    h3b = head_ref[hv + 6:hv + 7, :]
    h2w = head_ref[h2w_off:h2w_off + FF, 0:HALF]               # (FF, HALF)
    h3w = head_ref[h3w_off:h3w_off + HALF, :]                  # (HALF, 128) zero-padded

    h1 = jnp.maximum(
        (jnp.dot(flat, h1w, preferred_element_type=jnp.float32) + h1b)
        * bn1_s + bn1_sh, 0.0)
    h2 = jnp.maximum(
        (jnp.dot(h1, h2w, preferred_element_type=jnp.float32) + h2b)
        * bn2_s + bn2_sh, 0.0)
    # Lane-dense (B, 128) logits block; wrapper slices back to NUM_CLASSES.
    out_ref[...] = jnp.dot(h2, h3w, preferred_element_type=jnp.float32) + h3b


def prepare_params(params, num_cat):
    """Host-side prep: fuse/transpose weights to (in, out), fold eval-mode
    BatchNorm, and pack everything into two contiguous f32 slabs."""
    (np_w, np_b, in_w, in_b, out_w, out_b, g1, be1, g2, be2,
     f1w, f1b, f2w, f2b, h1w, h1b, bn1g, bn1b, bn1m, bn1v,
     h2w, h2b, bn2g, bn2b, bn2m, bn2v, h3w, h3b) = params
    L, E, FF, HALF = NUM_LAYERS, EMBED_DIM, FF_HIDDEN, FF_HIDDEN // 2
    S = 1 + num_cat
    num_dim = np_w.shape[1]
    np_k = ((num_dim + 7) // 8) * 8

    # ----- per-layer slab: (L, 3E + 8 + FF, 128) -----
    lrows = 3 * E + 8 + FF
    layers = jnp.zeros((L, lrows, LANES), jnp.float32)
    layers = layers.at[:, 0:E, 0:3 * E].set(in_w.transpose(0, 2, 1))      # wqkv
    v = E
    layers = layers.at[:, v + 0, 0:3 * E].set(in_b[:, 0, :])
    layers = layers.at[:, v + 1, 0:E].set(out_b[:, 0, :])
    layers = layers.at[:, v + 2, 0:E].set(g1[:, 0, :])
    layers = layers.at[:, v + 3, 0:E].set(be1[:, 0, :])
    layers = layers.at[:, v + 4, 0:FF].set(f1b[:, 0, :])
    layers = layers.at[:, v + 5, 0:E].set(f2b[:, 0, :])
    layers = layers.at[:, v + 6, 0:E].set(g2[:, 0, :])
    layers = layers.at[:, v + 7, 0:E].set(be2[:, 0, :])
    layers = layers.at[:, E + 8:2 * E + 8, 0:E].set(out_w.transpose(0, 2, 1))       # wo
    layers = layers.at[:, 2 * E + 8:3 * E + 8, 0:FF].set(f1w.transpose(0, 2, 1))    # w1
    layers = layers.at[:, 3 * E + 8:3 * E + 8 + FF, 0:E].set(f2w.transpose(0, 2, 1))  # w2

    # ----- fold eval-mode BatchNorm into scale/shift -----
    bn1_s = bn1g / jnp.sqrt(bn1v + BN_EPS)
    bn1_sh = bn1b - bn1m * bn1_s
    bn2_s = bn2g / jnp.sqrt(bn2v + BN_EPS)
    bn2_sh = bn2b - bn2m * bn2_s

    # ----- MLP-head / numerical-proj slab: (S*E + 8 + FF + HALF + np_k, 128) -----
    hrows = S * E + 8 + FF + HALF + np_k
    head = jnp.zeros((hrows, LANES), jnp.float32)
    head = head.at[0:S * E, 0:FF].set(h1w.T)                              # (S*E, FF)
    hv = S * E
    head = head.at[hv + 0, 0:FF].set(h1b[0])
    head = head.at[hv + 1, 0:FF].set(bn1_s[0])
    head = head.at[hv + 2, 0:FF].set(bn1_sh[0])
    head = head.at[hv + 3, 0:HALF].set(h2b[0])
    head = head.at[hv + 4, 0:HALF].set(bn2_s[0])
    head = head.at[hv + 5, 0:HALF].set(bn2_sh[0])
    head = head.at[hv + 6, 0:NUM_CLASSES].set(h3b[0])
    head = head.at[hv + 7, 0:E].set(np_b[0])
    head = head.at[hv + 8:hv + 8 + FF, 0:HALF].set(h2w.T)
    head = head.at[hv + 8 + FF:hv + 8 + FF + HALF, 0:NUM_CLASSES].set(h3w.T)
    head = head.at[hv + 8 + FF + HALF:hv + 8 + FF + HALF + num_dim, 0:E].set(np_w.T)
    return layers, head


@jax.jit
def tab_transformer_forward(x_num, cat_emb, layers_slab, head_slab):
    B, C, E = cat_emb.shape
    S = 1 + C
    # Token-major row layout: row s*B + b (s=0 numerical token, s>=1 categorical).
    cat_tok = cat_emb.transpose(1, 0, 2).reshape(C * B, E)
    np_k = head_slab.shape[0] - (S * E + 8 + FF_HIDDEN + FF_HIDDEN // 2)
    x_num_pad = jnp.pad(x_num, ((0, 0), (0, np_k - x_num.shape[1])))

    vmem = pl.BlockSpec(memory_space=pltpu.MemorySpace.VMEM)
    out = pl.pallas_call(
        tab_transformer_kernel,
        out_shape=jax.ShapeDtypeStruct((B, PADDED_CLASSES), jnp.float32),
        in_specs=[vmem] * 4,
        out_specs=vmem,
    )(x_num_pad, cat_tok, layers_slab, head_slab)
    return out[:, :NUM_CLASSES]


def init_params(key, num_dim, num_cat):
    """Deterministic synthetic parameters (torch weight-shape conventions)."""
    E, L, FF, HALF = EMBED_DIM, NUM_LAYERS, FF_HIDDEN, FF_HIDDEN // 2
    mlp_in = E * (1 + num_cat)
    keys = iter(jax.random.split(key, 64))

    def rnd(shape, s=0.1):
        return (s * jax.random.normal(next(keys), shape)).astype(jnp.float32)

    params = [
        rnd((E, num_dim)), rnd((1, E)),                          # numerical_proj
        rnd((L, 3 * E, E)), rnd((L, 1, 3 * E)),                  # attn in_proj
        rnd((L, E, E)), rnd((L, 1, E)),                          # attn out_proj
        jnp.ones((L, 1, E), jnp.float32), jnp.zeros((L, 1, E), jnp.float32),   # ln1
        jnp.ones((L, 1, E), jnp.float32), jnp.zeros((L, 1, E), jnp.float32),   # ln2
        rnd((L, FF, E)), rnd((L, 1, FF)),                        # ffn linear1
        rnd((L, E, FF)), rnd((L, 1, E)),                         # ffn linear2
        rnd((FF, mlp_in)), rnd((1, FF)),                         # head linear1
        jnp.ones((1, FF), jnp.float32), jnp.zeros((1, FF), jnp.float32),       # bn1 g,b
        rnd((1, FF), 0.05), 1.0 + jnp.abs(rnd((1, FF), 0.1)),    # bn1 running m,v
        rnd((HALF, FF)), rnd((1, HALF)),                         # head linear2
        jnp.ones((1, HALF), jnp.float32), jnp.zeros((1, HALF), jnp.float32),   # bn2 g,b
        rnd((1, HALF), 0.05), 1.0 + jnp.abs(rnd((1, HALF), 0.1)),# bn2 running m,v
        rnd((NUM_CLASSES, HALF)), rnd((1, NUM_CLASSES)),         # head linear3
    ]
    return params


def reference_forward(x_num, cat_emb, params):
    """Pure-JAX reference mirroring the PyTorch forward (eval mode)."""
    (np_w, np_b, in_w, in_b, out_w, out_b, g1, be1, g2, be2,
     f1w, f1b, f2w, f2b, h1w, h1b, bn1g, bn1b, bn1m, bn1v,
     h2w, h2b, bn2g, bn2b, bn2m, bn2v, h3w, h3b) = params
    E, D = EMBED_DIM, HEAD_DIM
    num_proj = x_num @ np_w.T + np_b[0]
    x = jnp.concatenate([num_proj[:, None, :], cat_emb], axis=1)
    B, S, _ = x.shape

    def ln(x, g, b):
        mu = jnp.mean(x, axis=-1, keepdims=True)
        var = jnp.mean(jnp.square(x - mu), axis=-1, keepdims=True)
        return (x - mu) / jnp.sqrt(var + LN_EPS) * g + b

    for l in range(NUM_LAYERS):
        qkv = jnp.einsum('bse,fe->bsf', x, in_w[l]) + in_b[l, 0]
        q, k, v = qkv[..., :E], qkv[..., E:2 * E], qkv[..., 2 * E:]
        q = q.reshape(B, S, NUM_HEADS, D).transpose(0, 2, 1, 3)
        k = k.reshape(B, S, NUM_HEADS, D).transpose(0, 2, 1, 3)
        v = v.reshape(B, S, NUM_HEADS, D).transpose(0, 2, 1, 3)
        sc = jnp.einsum('bhsd,bhtd->bhst', q, k) / jnp.sqrt(float(D))
        p = jax.nn.softmax(sc, axis=-1)
        attn = jnp.einsum('bhst,bhtd->bhsd', p, v).transpose(0, 2, 1, 3).reshape(B, S, E)
        attn = jnp.einsum('bse,fe->bsf', attn, out_w[l]) + out_b[l, 0]
        x = ln(x + attn, g1[l, 0], be1[l, 0])
        ff = jax.nn.relu(jnp.einsum('bse,fe->bsf', x, f1w[l]) + f1b[l, 0])
        ff = jnp.einsum('bsf,ef->bse', ff, f2w[l]) + f2b[l, 0]
        x = ln(x + ff, g2[l, 0], be2[l, 0])

    flat = x.reshape(B, S * E)
    h1 = jax.nn.relu((flat @ h1w.T + h1b[0] - bn1m[0]) / jnp.sqrt(bn1v[0] + BN_EPS)
                     * bn1g[0] + bn1b[0])
    h2 = jax.nn.relu((h1 @ h2w.T + h2b[0] - bn2m[0]) / jnp.sqrt(bn2v[0] + BN_EPS)
                     * bn2g[0] + bn2b[0])
    return h2 @ h3w.T + h3b[0]


if __name__ == "__main__":
    B = 4
    NUM_NUMERICAL = 6
    CATEGORICAL_DIMS = {"Crop_Type": 11, "Soil_Type": 5}   # sorted order matches torch ModuleList
    cat_sizes = [n for _, n in sorted(CATEGORICAL_DIMS.items())]
    num_cat = len(cat_sizes)

    root = jax.random.PRNGKey(0)
    k_num, k_cat, k_emb, k_params = jax.random.split(root, 4)

    x_numerical = jax.random.normal(k_num, (B, NUM_NUMERICAL), dtype=jnp.float32)
    cat_cols = []
    for i, n in enumerate(cat_sizes):
        cat_cols.append(jax.random.randint(jax.random.fold_in(k_cat, i), (B,), 0, n))
    x_categorical = jnp.stack(cat_cols, axis=1).astype(jnp.int32)   # (B, C)

    # Embedding tables (glue: gather done in plain JAX, not in the kernel hot path).
    emb_tables = [
        (0.1 * jax.random.normal(jax.random.fold_in(k_emb, i), (n, EMBED_DIM))).astype(jnp.float32)
        for i, n in enumerate(cat_sizes)
    ]
    cat_emb = jnp.stack(
        [emb_tables[i][x_categorical[:, i]] for i in range(num_cat)], axis=1)  # (B, C, E)

    params = init_params(k_params, NUM_NUMERICAL, num_cat)
    layers_slab, head_slab = prepare_params(params, num_cat)

    logits = tab_transformer_forward(x_numerical, cat_emb, layers_slab, head_slab)
    logits = jax.block_until_ready(logits)

    ref = reference_forward(x_numerical, cat_emb, params)
    assert logits.shape == (B, NUM_CLASSES)
    if not jnp.allclose(logits, ref, atol=2e-3, rtol=2e-3):
        raise AssertionError("Pallas kernel output mismatch vs JAX reference")

    print("KERNEL_OK")
</pallas_src>

<mosaic_0001>
module attributes {stable_mosaic.version = 11 : i64} {
  func.func @tab_transformer_kernel(%arg0: memref<4x8xf32, #tpu.memory_space<vmem>>, %arg1: memref<8x32xf32, #tpu.memory_space<vmem>>, %arg2: memref<3x232x128xf32, #tpu.memory_space<vmem>>, %arg3: memref<304x128xf32, #tpu.memory_space<vmem>>, %arg4: memref<4x128xf32, #tpu.memory_space<vmem>>) attributes {dimension_semantics = [], scalar_prefetch = 0 : i64, scratch_operands = 0 : i64, tpu.core_type = #tpu.core_type<tc>} {
    %c296 = arith.constant 296 : index
    %c0 = arith.constant 0 : index
    %0 = vector.load %arg3[%c296, %c0] : memref<304x128xf32, #tpu.memory_space<vmem>>, vector<8x32xf32>
    %c103 = arith.constant 103 : index
    %c0_0 = arith.constant 0 : index
    %1 = vector.load %arg3[%c103, %c0_0] : memref<304x128xf32, #tpu.memory_space<vmem>>, vector<1x32xf32>
    %c0_1 = arith.constant 0 : index
    %c0_2 = arith.constant 0 : index
    %2 = vector.load %arg0[%c0_1, %c0_2] : memref<4x8xf32, #tpu.memory_space<vmem>>, vector<4x8xf32>
    %cst = arith.constant dense<0.000000e+00> : vector<4x32xf32>
    %3 = tpu.matmul %2, %0, %cst {dimension_numbers = #tpu.dot_dimension_numbers<[1], [0], [0], [1], [0, 0, 1, 1], [], []>} : vector<4x8xf32>, vector<8x32xf32>, vector<4x32xf32> -> vector<4x32xf32>
    %4 = vector.broadcast %1 : vector<1x32xf32> to vector<4x32xf32>
    %5 = arith.addf %3, %4 : vector<4x32xf32>
    %c0_3 = arith.constant 0 : index
    %c0_4 = arith.constant 0 : index
    %6 = vector.load %arg1[%c0_3, %c0_4] : memref<8x32xf32, #tpu.memory_space<vmem>>, vector<8x32xf32>
    %7 = tpu.concatenate %5, %6 in 0 : vector<4x32xf32>, vector<8x32xf32> -> vector<12x32xf32>
    %8 = tpu.iota {dimensions = array<i32: 0>} : vector<12x12xi32>
    %c4_i32 = arith.constant 4 : i32
    %c0_i32 = arith.constant 0 : i32
    %9 = arith.cmpi eq, %c4_i32, %c0_i32 : i32
    %c1_i32 = arith.constant 1 : i32
    %10 = arith.select %9, %c1_i32, %c4_i32 : i32
    %11 = vector.broadcast %10 : i32 to vector<12x12xi32>
    %12 = arith.remsi %8, %11 : vector<12x12xi32>
    %c0_i32_5 = arith.constant 0 : i32
    %13 = vector.broadcast %c0_i32_5 : i32 to vector<12x12xi32>
    %14 = arith.cmpi ne, %12, %13 : vector<12x12xi32>
    %c0_i32_6 = arith.constant 0 : i32
    %15 = vector.broadcast %c0_i32_6 : i32 to vector<12x12xi32>
    %16 = arith.cmpi slt, %12, %15 : vector<12x12xi32>
    %c0_i32_7 = arith.constant 0 : i32
    %17 = arith.cmpi slt, %10, %c0_i32_7 : i32
    %18 = vector.broadcast %17 : i1 to vector<12x12xi1>
    %19 = vector.broadcast %18 : vector<12x12xi1> to vector<12x12xi1>
    %20 = arith.xori %16, %19 : vector<12x12xi1>
    %21 = arith.andi %20, %14 : vector<12x12xi1>
    %22 = vector.broadcast %10 : i32 to vector<12x12xi32>
    %23 = arith.addi %12, %22 : vector<12x12xi32>
    %24 = arith.select %21, %23, %12 : vector<12x12xi1>, vector<12x12xi32>
    %25 = tpu.iota {dimensions = array<i32: 1>} : vector<12x12xi32>
    %c4_i32_8 = arith.constant 4 : i32
    %c0_i32_9 = arith.constant 0 : i32
    %26 = arith.cmpi eq, %c4_i32_8, %c0_i32_9 : i32
    %c1_i32_10 = arith.constant 1 : i32
    %27 = arith.select %26, %c1_i32_10, %c4_i32_8 : i32
    %28 = vector.broadcast %27 : i32 to vector<12x12xi32>
    %29 = arith.remsi %25, %28 : vector<12x12xi32>
    %c0_i32_11 = arith.constant 0 : i32
    %30 = vector.broadcast %c0_i32_11 : i32 to vector<12x12xi32>
    %31 = arith.cmpi ne, %29, %30 : vector<12x12xi32>
    %c0_i32_12 = arith.constant 0 : i32
    %32 = vector.broadcast %c0_i32_12 : i32 to vector<12x12xi32>
    %33 = arith.cmpi slt, %29, %32 : vector<12x12xi32>
    %c0_i32_13 = arith.constant 0 : i32
    %34 = arith.cmpi slt, %27, %c0_i32_13 : i32
    %35 = vector.broadcast %34 : i1 to vector<12x12xi1>
    %36 = vector.broadcast %35 : vector<12x12xi1> to vector<12x12xi1>
    %37 = arith.xori %33, %36 : vector<12x12xi1>
    %38 = arith.andi %37, %31 : vector<12x12xi1>
    %39 = vector.broadcast %27 : i32 to vector<12x12xi32>
    %40 = arith.addi %29, %39 : vector<12x12xi32>
    %41 = arith.select %38, %40, %29 : vector<12x12xi1>, vector<12x12xi32>
    %42 = arith.cmpi eq, %24, %41 : vector<12x12xi32>
    %cst_14 = arith.constant 0.000000e+00 : f32
    %cst_15 = arith.constant -1.000000e+09 : f32
    %43 = vector.broadcast %cst_14 : f32 to vector<12x12xf32>
    %44 = vector.broadcast %cst_15 : f32 to vector<12x12xf32>
    %45 = arith.select %42, %43, %44 : vector<12x12xi1>, vector<12x12xf32>
    %c0_i32_16 = arith.constant 0 : i32
    %c3_i32 = arith.constant 3 : i32
    %46 = arith.addi %c0_i32_16, %c3_i32 : i32
    %c1_i32_17 = arith.constant 1 : i32
    %47 = scf.for %arg5 = %c0_i32_16 to %46 step %c1_i32_17 iter_args(%arg6 = %7) -> (vector<12x32xf32>)  : i32 {
      %84 = arith.index_cast %arg5 : i32 to index
      %c0_37 = arith.constant 0 : index
      %c0_38 = arith.constant 0 : index
      %85 = vector.load %arg2[%84, %c0_37, %c0_38] : memref<3x232x128xf32, #tpu.memory_space<vmem>>, vector<1x32x96xf32>
      %86 = vector.shape_cast %85 : vector<1x32x96xf32> to vector<32x96xf32>
      %87 = arith.index_cast %arg5 : i32 to index
      %c40 = arith.constant 40 : index
      %c0_39 = arith.constant 0 : index
      %88 = vector.load %arg2[%87, %c40, %c0_39] : memref<3x232x128xf32, #tpu.memory_space<vmem>>, vector<1x32x32xf32>
      %89 = vector.shape_cast %88 : vector<1x32x32xf32> to vector<32x32xf32>
      %90 = arith.index_cast %arg5 : i32 to index
      %c72 = arith.constant 72 : index
      %c0_40 = arith.constant 0 : index
      %91 = vector.load %arg2[%90, %c72, %c0_40] : memref<3x232x128xf32, #tpu.memory_space<vmem>>, vector<1x32x128xf32>
      %92 = vector.shape_cast %91 : vector<1x32x128xf32> to vector<32x128xf32>
      %93 = arith.index_cast %arg5 : i32 to index
      %c104_41 = arith.constant 104 : index
      %c0_42 = arith.constant 0 : index
      %94 = vector.load %arg2[%93, %c104_41, %c0_42] : memref<3x232x128xf32, #tpu.memory_space<vmem>>, vector<1x128x32xf32>
      %95 = vector.shape_cast %94 : vector<1x128x32xf32> to vector<128x32xf32>
      %96 = arith.index_cast %arg5 : i32 to index
      %c32 = arith.constant 32 : index
      %c0_43 = arith.constant 0 : index
      %97 = vector.load %arg2[%96, %c32, %c0_43] : memref<3x232x128xf32, #tpu.memory_space<vmem>>, vector<1x1x96xf32>
      %98 = vector.shape_cast %97 : vector<1x1x96xf32> to vector<1x96xf32>
      %99 = arith.index_cast %arg5 : i32 to index
      %c33 = arith.constant 33 : index
      %c0_44 = arith.constant 0 : index
      %100 = vector.load %arg2[%99, %c33, %c0_44] : memref<3x232x128xf32, #tpu.memory_space<vmem>>, vector<1x1x32xf32>
      %101 = vector.shape_cast %100 : vector<1x1x32xf32> to vector<1x32xf32>
      %102 = arith.index_cast %arg5 : i32 to index
      %c34 = arith.constant 34 : index
      %c0_45 = arith.constant 0 : index
      %103 = vector.load %arg2[%102, %c34, %c0_45] : memref<3x232x128xf32, #tpu.memory_space<vmem>>, vector<1x1x32xf32>
      %104 = vector.shape_cast %103 : vector<1x1x32xf32> to vector<1x32xf32>
      %105 = arith.index_cast %arg5 : i32 to index
      %c35 = arith.constant 35 : index
      %c0_46 = arith.constant 0 : index
      %106 = vector.load %arg2[%105, %c35, %c0_46] : memref<3x232x128xf32, #tpu.memory_space<vmem>>, vector<1x1x32xf32>
      %107 = vector.shape_cast %106 : vector<1x1x32xf32> to vector<1x32xf32>
      %108 = arith.index_cast %arg5 : i32 to index
      %c36 = arith.constant 36 : index
      %c0_47 = arith.constant 0 : index
      %109 = vector.load %arg2[%108, %c36, %c0_47] : memref<3x232x128xf32, #tpu.memory_space<vmem>>, vector<1x1x128xf32>
      %110 = vector.shape_cast %109 : vector<1x1x128xf32> to vector<1x128xf32>
      %111 = arith.index_cast %arg5 : i32 to index
      %c37 = arith.constant 37 : index
      %c0_48 = arith.constant 0 : index
      %112 = vector.load %arg2[%111, %c37, %c0_48] : memref<3x232x128xf32, #tpu.memory_space<vmem>>, vector<1x1x32xf32>
      %113 = vector.shape_cast %112 : vector<1x1x32xf32> to vector<1x32xf32>
      %114 = arith.index_cast %arg5 : i32 to index
      %c38 = arith.constant 38 : index
      %c0_49 = arith.constant 0 : index
      %115 = vector.load %arg2[%114, %c38, %c0_49] : memref<3x232x128xf32, #tpu.memory_space<vmem>>, vector<1x1x32xf32>
      %116 = vector.shape_cast %115 : vector<1x1x32xf32> to vector<1x32xf32>
      %117 = arith.index_cast %arg5 : i32 to index
      %c39 = arith.constant 39 : index
      %c0_50 = arith.constant 0 : index
      %118 = vector.load %arg2[%117, %c39, %c0_50] : memref<3x232x128xf32, #tpu.memory_space<vmem>>, vector<1x1x32xf32>
      %119 = vector.shape_cast %118 : vector<1x1x32xf32> to vector<1x32xf32>
      %cst_51 = arith.constant dense<0.000000e+00> : vector<12x96xf32>
      %120 = tpu.matmul %arg6, %86, %cst_51 {dimension_numbers = #tpu.dot_dimension_numbers<[1], [0], [0], [1], [0, 0, 1, 1], [], []>} : vector<12x32xf32>, vector<32x96xf32>, vector<12x96xf32> -> vector<12x96xf32>
      %121 = vector.broadcast %98 : vector<1x96xf32> to vector<12x96xf32>
      %122 = arith.addf %120, %121 : vector<12x96xf32>
      %123 = vector.extract_strided_slice %122 {offsets = [0, 0], sizes = [12, 8], strides = [1, 1]} : vector<12x96xf32> to vector<12x8xf32>
      %124 = vector.extract_strided_slice %122 {offsets = [0, 32], sizes = [12, 8], strides = [1, 1]} : vector<12x96xf32> to vector<12x8xf32>
      %125 = vector.extract_strided_slice %122 {offsets = [0, 64], sizes = [12, 8], strides = [1, 1]} : vector<12x96xf32> to vector<12x8xf32>
      "tpu.trace_start"() <{level = 10 : i32, message = "nd,md->nm"}> : () -> ()
      %cst_52 = arith.constant dense<0.000000e+00> : vector<12x12xf32>
      %126 = tpu.matmul %123, %124, %cst_52 {dimension_numbers = #tpu.dot_dimension_numbers<[1], [1], [0], [0], [0, 0, 1, 0], [], []>} : vector<12x8xf32>, vector<12x8xf32>, vector<12x12xf32> -> vector<12x12xf32>
      "tpu.trace_stop"() : () -> ()
      %cst_53 = arith.constant 0.353553385 : f32
      %127 = vector.broadcast %cst_53 : f32 to vector<12x12xf32>
      %128 = arith.mulf %126, %127 : vector<12x12xf32>
      %129 = arith.addf %128, %45 : vector<12x12xf32>
      %cst_54 = arith.constant dense<0xFF800000> : vector<12xf32>
      %130 = vector.multi_reduction <maximumf>, %129, %cst_54 [1] : vector<12x12xf32> to vector<12xf32>
      %131 = vector.shape_cast %130 : vector<12xf32> to vector<12x1xf32>
      %132 = vector.broadcast %131 : vector<12x1xf32> to vector<12x12xf32>
      %133 = arith.subf %129, %132 : vector<12x12xf32>
      %134 = math.exp %133 : vector<12x12xf32>
      %cst_55 = arith.constant dense<0.000000e+00> : vector<12xf32>
      %135 = vector.multi_reduction <add>, %134, %cst_55 [1] : vector<12x12xf32> to vector<12xf32>
      %136 = vector.shape_cast %135 : vector<12xf32> to vector<12x1xf32>
      %137 = tpu.reciprocal %136 {approx = true} : vector<12x1xf32> -> vector<12x1xf32>
      %138 = vector.broadcast %137 : vector<12x1xf32> to vector<12x12xf32>
      %139 = arith.mulf %134, %138 : vector<12x12xf32>
      %cst_56 = arith.constant dense<0.000000e+00> : vector<12x8xf32>
      %140 = tpu.matmul %139, %125, %cst_56 {dimension_numbers = #tpu.dot_dimension_numbers<[1], [0], [0], [1], [0, 0, 1, 1], [], []>} : vector<12x12xf32>, vector<12x8xf32>, vector<12x8xf32> -> vector<12x8xf32>
      %141 = vector.extract_strided_slice %122 {offsets = [0, 8], sizes = [12, 8], strides = [1, 1]} : vector<12x96xf32> to vector<12x8xf32>
      %142 = vector.extract_strided_slice %122 {offsets = [0, 40], sizes = [12, 8], strides = [1, 1]} : vector<12x96xf32> to vector<12x8xf32>
      %143 = vector.extract_strided_slice %122 {offsets = [0, 72], sizes = [12, 8], strides = [1, 1]} : vector<12x96xf32> to vector<12x8xf32>
      "tpu.trace_start"() <{level = 10 : i32, message = "nd,md->nm"}> : () -> ()
      %cst_57 = arith.constant dense<0.000000e+00> : vector<12x12xf32>
      %144 = tpu.matmul %141, %142, %cst_57 {dimension_numbers = #tpu.dot_dimension_numbers<[1], [1], [0], [0], [0, 0, 1, 0], [], []>} : vector<12x8xf32>, vector<12x8xf32>, vector<12x12xf32> -> vector<12x12xf32>
      "tpu.trace_stop"() : () -> ()
      %cst_58 = arith.constant 0.353553385 : f32
      %145 = vector.broadcast %cst_58 : f32 to vector<12x12xf32>
      %146 = arith.mulf %144, %145 : vector<12x12xf32>
      %147 = arith.addf %146, %45 : vector<12x12xf32>
      %cst_59 = arith.constant dense<0xFF800000> : vector<12xf32>
      %148 = vector.multi_reduction <maximumf>, %147, %cst_59 [1] : vector<12x12xf32> to vector<12xf32>
      %149 = vector.shape_cast %148 : vector<12xf32> to vector<12x1xf32>
      %150 = vector.broadcast %149 : vector<12x1xf32> to vector<12x12xf32>
      %151 = arith.subf %147, %150 : vector<12x12xf32>
      %152 = math.exp %151 : vector<12x12xf32>
      %cst_60 = arith.constant dense<0.000000e+00> : vector<12xf32>
      %153 = vector.multi_reduction <add>, %152, %cst_60 [1] : vector<12x12xf32> to vector<12xf32>
      %154 = vector.shape_cast %153 : vector<12xf32> to vector<12x1xf32>
      %155 = tpu.reciprocal %154 {approx = true} : vector<12x1xf32> -> vector<12x1xf32>
      %156 = vector.broadcast %155 : vector<12x1xf32> to vector<12x12xf32>
      %157 = arith.mulf %152, %156 : vector<12x12xf32>
      %cst_61 = arith.constant dense<0.000000e+00> : vector<12x8xf32>
      %158 = tpu.matmul %157, %143, %cst_61 {dimension_numbers = #tpu.dot_dimension_numbers<[1], [0], [0], [1], [0, 0, 1, 1], [], []>} : vector<12x12xf32>, vector<12x8xf32>, vector<12x8xf32> -> vector<12x8xf32>
      %159 = vector.extract_strided_slice %122 {offsets = [0, 16], sizes = [12, 8], strides = [1, 1]} : vector<12x96xf32> to vector<12x8xf32>
      %160 = vector.extract_strided_slice %122 {offsets = [0, 48], sizes = [12, 8], strides = [1, 1]} : vector<12x96xf32> to vector<12x8xf32>
      %161 = vector.extract_strided_slice %122 {offsets = [0, 80], sizes = [12, 8], strides = [1, 1]} : vector<12x96xf32> to vector<12x8xf32>
      "tpu.trace_start"() <{level = 10 : i32, message = "nd,md->nm"}> : () -> ()
      %cst_62 = arith.constant dense<0.000000e+00> : vector<12x12xf32>
      %162 = tpu.matmul %159, %160, %cst_62 {dimension_numbers = #tpu.dot_dimension_numbers<[1], [1], [0], [0], [0, 0, 1, 0], [], []>} : vector<12x8xf32>, vector<12x8xf32>, vector<12x12xf32> -> vector<12x12xf32>
      "tpu.trace_stop"() : () -> ()
      %cst_63 = arith.constant 0.353553385 : f32
      %163 = vector.broadcast %cst_63 : f32 to vector<12x12xf32>
      %164 = arith.mulf %162, %163 : vector<12x12xf32>
      %165 = arith.addf %164, %45 : vector<12x12xf32>
      %cst_64 = arith.constant dense<0xFF800000> : vector<12xf32>
      %166 = vector.multi_reduction <maximumf>, %165, %cst_64 [1] : vector<12x12xf32> to vector<12xf32>
      %167 = vector.shape_cast %166 : vector<12xf32> to vector<12x1xf32>
      %168 = vector.broadcast %167 : vector<12x1xf32> to vector<12x12xf32>
      %169 = arith.subf %165, %168 : vector<12x12xf32>
      %170 = math.exp %169 : vector<12x12xf32>
      %cst_65 = arith.constant dense<0.000000e+00> : vector<12xf32>
      %171 = vector.multi_reduction <add>, %170, %cst_65 [1] : vector<12x12xf32> to vector<12xf32>
      %172 = vector.shape_cast %171 : vector<12xf32> to vector<12x1xf32>
      %173 = tpu.reciprocal %172 {approx = true} : vector<12x1xf32> -> vector<12x1xf32>
      %174 = vector.broadcast %173 : vector<12x1xf32> to vector<12x12xf32>
      %175 = arith.mulf %170, %174 : vector<12x12xf32>
      %cst_66 = arith.constant dense<0.000000e+00> : vector<12x8xf32>
      %176 = tpu.matmul %175, %161, %cst_66 {dimension_numbers = #tpu.dot_dimension_numbers<[1], [0], [0], [1], [0, 0, 1, 1], [], []>} : vector<12x12xf32>, vector<12x8xf32>, vector<12x8xf32> -> vector<12x8xf32>
      %177 = vector.extract_strided_slice %122 {offsets = [0, 24], sizes = [12, 8], strides = [1, 1]} : vector<12x96xf32> to vector<12x8xf32>
      %178 = vector.extract_strided_slice %122 {offsets = [0, 56], sizes = [12, 8], strides = [1, 1]} : vector<12x96xf32> to vector<12x8xf32>
      %179 = vector.extract_strided_slice %122 {offsets = [0, 88], sizes = [12, 8], strides = [1, 1]} : vector<12x96xf32> to vector<12x8xf32>
      "tpu.trace_start"() <{level = 10 : i32, message = "nd,md->nm"}> : () -> ()
      %cst_67 = arith.constant dense<0.000000e+00> : vector<12x12xf32>
      %180 = tpu.matmul %177, %178, %cst_67 {dimension_numbers = #tpu.dot_dimension_numbers<[1], [1], [0], [0], [0, 0, 1, 0], [], []>} : vector<12x8xf32>, vector<12x8xf32>, vector<12x12xf32> -> vector<12x12xf32>
      "tpu.trace_stop"() : () -> ()
      %cst_68 = arith.constant 0.353553385 : f32
      %181 = vector.broadcast %cst_68 : f32 to vector<12x12xf32>
      %182 = arith.mulf %180, %181 : vector<12x12xf32>
      %183 = arith.addf %182, %45 : vector<12x12xf32>
      %cst_69 = arith.constant dense<0xFF800000> : vector<12xf32>
      %184 = vector.multi_reduction <maximumf>, %183, %cst_69 [1] : vector<12x12xf32> to vector<12xf32>
      %185 = vector.shape_cast %184 : vector<12xf32> to vector<12x1xf32>
      %186 = vector.broadcast %185 : vector<12x1xf32> to vector<12x12xf32>
      %187 = arith.subf %183, %186 : vector<12x12xf32>
      %188 = math.exp %187 : vector<12x12xf32>
      %cst_70 = arith.constant dense<0.000000e+00> : vector<12xf32>
      %189 = vector.multi_reduction <add>, %188, %cst_70 [1] : vector<12x12xf32> to vector<12xf32>
      %190 = vector.shape_cast %189 : vector<12xf32> to vector<12x1xf32>
      %191 = tpu.reciprocal %190 {approx = true} : vector<12x1xf32> -> vector<12x1xf32>
      %192 = vector.broadcast %191 : vector<12x1xf32> to vector<12x12xf32>
      %193 = arith.mulf %188, %192 : vector<12x12xf32>
      %cst_71 = arith.constant dense<0.000000e+00> : vector<12x8xf32>
      %194 = tpu.matmul %193, %179, %cst_71 {dimension_numbers = #tpu.dot_dimension_numbers<[1], [0], [0], [1], [0, 0, 1, 1], [], []>} : vector<12x12xf32>, vector<12x8xf32>, vector<12x8xf32> -> vector<12x8xf32>
      %195 = tpu.concatenate %140, %158, %176, %194 in 1 : vector<12x8xf32>, vector<12x8xf32>, vector<12x8xf32>, vector<12x8xf32> -> vector<12x32xf32>
      %cst_72 = arith.constant dense<0.000000e+00> : vector<12x32xf32>
      %196 = tpu.matmul %195, %89, %cst_72 {dimension_numbers = #tpu.dot_dimension_numbers<[1], [0], [0], [1], [0, 0, 1, 1], [], []>} : vector<12x32xf32>, vector<32x32xf32>, vector<12x32xf32> -> vector<12x32xf32>
      %197 = vector.broadcast %101 : vector<1x32xf32> to vector<12x32xf32>
      %198 = arith.addf %196, %197 : vector<12x32xf32>
      %199 = arith.addf %arg6, %198 : vector<12x32xf32>
      %cst_73 = arith.constant dense<0.000000e+00> : vector<12xf32>
      %200 = vector.multi_reduction <add>, %199, %cst_73 [1] : vector<12x32xf32> to vector<12xf32>
      %201 = vector.shape_cast %200 : vector<12xf32> to vector<12x1xf32>
      %cst_74 = arith.constant 3.200000e+01 : f32
      %202 = vector.broadcast %cst_74 : f32 to vector<12x1xf32>
      %203 = arith.divf %201, %202 : vector<12x1xf32>
      %204 = vector.broadcast %203 : vector<12x1xf32> to vector<12x32xf32>
      %205 = arith.subf %199, %204 : vector<12x32xf32>
      %206 = arith.mulf %205, %205 : vector<12x32xf32>
      %cst_75 = arith.constant dense<0.000000e+00> : vector<12xf32>
      %207 = vector.multi_reduction <add>, %206, %cst_75 [1] : vector<12x32xf32> to vector<12xf32>
      %208 = vector.shape_cast %207 : vector<12xf32> to vector<12x1xf32>
      %cst_76 = arith.constant 3.200000e+01 : f32
      %209 = vector.broadcast %cst_76 : f32 to vector<12x1xf32>
      %210 = arith.divf %208, %209 : vector<12x1xf32>
      %211 = vector.broadcast %203 : vector<12x1xf32> to vector<12x32xf32>
      %212 = arith.subf %199, %211 : vector<12x32xf32>
      %cst_77 = arith.constant 9.99999974E-6 : f32
      %213 = vector.broadcast %cst_77 : f32 to vector<12x1xf32>
      %214 = arith.addf %210, %213 : vector<12x1xf32>
      %215 = math.rsqrt %214 : vector<12x1xf32>
      %216 = vector.broadcast %215 : vector<12x1xf32> to vector<12x32xf32>
      %217 = arith.mulf %212, %216 : vector<12x32xf32>
      %218 = vector.broadcast %104 : vector<1x32xf32> to vector<12x32xf32>
      %219 = arith.mulf %217, %218 : vector<12x32xf32>
      %220 = vector.broadcast %107 : vector<1x32xf32> to vector<12x32xf32>
      %221 = arith.addf %219, %220 : vector<12x32xf32>
      %cst_78 = arith.constant dense<0.000000e+00> : vector<12x128xf32>
      %222 = tpu.matmul %221, %92, %cst_78 {dimension_numbers = #tpu.dot_dimension_numbers<[1], [0], [0], [1], [0, 0, 1, 1], [], []>} : vector<12x32xf32>, vector<32x128xf32>, vector<12x128xf32> -> vector<12x128xf32>
      %223 = vector.broadcast %110 : vector<1x128xf32> to vector<12x128xf32>
      %224 = arith.addf %222, %223 : vector<12x128xf32>
      %cst_79 = arith.constant 0.000000e+00 : f32
      %225 = vector.broadcast %cst_79 : f32 to vector<12x128xf32>
      %226 = arith.maximumf %224, %225 : vector<12x128xf32>
      %cst_80 = arith.constant dense<0.000000e+00> : vector<12x32xf32>
      %227 = tpu.matmul %226, %95, %cst_80 {dimension_numbers = #tpu.dot_dimension_numbers<[1], [0], [0], [1], [0, 0, 1, 1], [], []>} : vector<12x128xf32>, vector<128x32xf32>, vector<12x32xf32> -> vector<12x32xf32>
      %228 = vector.broadcast %113 : vector<1x32xf32> to vector<12x32xf32>
      %229 = arith.addf %227, %228 : vector<12x32xf32>
      %230 = arith.addf %221, %229 : vector<12x32xf32>
      %cst_81 = arith.constant dense<0.000000e+00> : vector<12xf32>
      %231 = vector.multi_reduction <add>, %230, %cst_81 [1] : vector<12x32xf32> to vector<12xf32>
      %232 = vector.shape_cast %231 : vector<12xf32> to vector<12x1xf32>
      %cst_82 = arith.constant 3.200000e+01 : f32
      %233 = vector.broadcast %cst_82 : f32 to vector<12x1xf32>
      %234 = arith.divf %232, %233 : vector<12x1xf32>
      %235 = vector.broadcast %234 : vector<12x1xf32> to vector<12x32xf32>
      %236 = arith.subf %230, %235 : vector<12x32xf32>
      %237 = arith.mulf %236, %236 : vector<12x32xf32>
      %cst_83 = arith.constant dense<0.000000e+00> : vector<12xf32>
      %238 = vector.multi_reduction <add>, %237, %cst_83 [1] : vector<12x32xf32> to vector<12xf32>
      %239 = vector.shape_cast %238 : vector<12xf32> to vector<12x1xf32>
      %cst_84 = arith.constant 3.200000e+01 : f32
      %240 = vector.broadcast %cst_84 : f32 to vector<12x1xf32>
      %241 = arith.divf %239, %240 : vector<12x1xf32>
      %242 = vector.broadcast %234 : vector<12x1xf32> to vector<12x32xf32>
      %243 = arith.subf %230, %242 : vector<12x32xf32>
      %cst_85 = arith.constant 9.99999974E-6 : f32
      %244 = vector.broadcast %cst_85 : f32 to vector<12x1xf32>
      %245 = arith.addf %241, %244 : vector<12x1xf32>
      %246 = math.rsqrt %245 : vector<12x1xf32>
      %247 = vector.broadcast %246 : vector<12x1xf32> to vector<12x32xf32>
      %248 = arith.mulf %243, %247 : vector<12x32xf32>
      %249 = vector.broadcast %116 : vector<1x32xf32> to vector<12x32xf32>
      %250 = arith.mulf %248, %249 : vector<12x32xf32>
      %251 = vector.broadcast %119 : vector<1x32xf32> to vector<12x32xf32>
      %252 = arith.addf %250, %251 : vector<12x32xf32>
      scf.yield %252 : vector<12x32xf32>
    }
    %c3_i32_18 = arith.constant 3 : i32
    %48 = vector.extract_strided_slice %47 {offsets = [0, 0], sizes = [4, 32], strides = [1, 1]} : vector<12x32xf32> to vector<4x32xf32>
    %49 = vector.extract_strided_slice %47 {offsets = [4, 0], sizes = [4, 32], strides = [1, 1]} : vector<12x32xf32> to vector<4x32xf32>
    %50 = vector.extract_strided_slice %47 {offsets = [8, 0], sizes = [4, 32], strides = [1, 1]} : vector<12x32xf32> to vector<4x32xf32>
    %51 = tpu.concatenate %48, %49, %50 in 1 : vector<4x32xf32>, vector<4x32xf32>, vector<4x32xf32> -> vector<4x96xf32>
    %c0_19 = arith.constant 0 : index
    %c0_20 = arith.constant 0 : index
    %52 = vector.load %arg3[%c0_19, %c0_20] : memref<304x128xf32, #tpu.memory_space<vmem>>, vector<96x128xf32>
    %c96 = arith.constant 96 : index
    %c0_21 = arith.constant 0 : index
    %53 = vector.load %arg3[%c96, %c0_21] : memref<304x128xf32, #tpu.memory_space<vmem>>, vector<1x128xf32>
    %c97 = arith.constant 97 : index
    %c0_22 = arith.constant 0 : index
    %54 = vector.load %arg3[%c97, %c0_22] : memref<304x128xf32, #tpu.memory_space<vmem>>, vector<1x128xf32>
    %c98 = arith.constant 98 : index
    %c0_23 = arith.constant 0 : index
    %55 = vector.load %arg3[%c98, %c0_23] : memref<304x128xf32, #tpu.memory_space<vmem>>, vector<1x128xf32>
    %c99 = arith.constant 99 : index
    %c0_24 = arith.constant 0 : index
    %56 = vector.load %arg3[%c99, %c0_24] : memref<304x128xf32, #tpu.memory_space<vmem>>, vector<1x64xf32>
    %c100 = arith.constant 100 : index
    %c0_25 = arith.constant 0 : index
    %57 = vector.load %arg3[%c100, %c0_25] : memref<304x128xf32, #tpu.memory_space<vmem>>, vector<1x64xf32>
    %c101 = arith.constant 101 : index
    %c0_26 = arith.constant 0 : index
    %58 = vector.load %arg3[%c101, %c0_26] : memref<304x128xf32, #tpu.memory_space<vmem>>, vector<1x64xf32>
    %c102 = arith.constant 102 : index
    %c0_27 = arith.constant 0 : index
    %59 = vector.load %arg3[%c102, %c0_27] : memref<304x128xf32, #tpu.memory_space<vmem>>, vector<1x128xf32>
    %c104 = arith.constant 104 : index
    %c0_28 = arith.constant 0 : index
    %60 = vector.load %arg3[%c104, %c0_28] : memref<304x128xf32, #tpu.memory_space<vmem>>, vector<128x64xf32>
    %c232 = arith.constant 232 : index
    %c0_29 = arith.constant 0 : index
    %61 = vector.load %arg3[%c232, %c0_29] : memref<304x128xf32, #tpu.memory_space<vmem>>, vector<64x128xf32>
    %cst_30 = arith.constant dense<0.000000e+00> : vector<4x128xf32>
    %62 = tpu.matmul %51, %52, %cst_30 {dimension_numbers = #tpu.dot_dimension_numbers<[1], [0], [0], [1], [0, 0, 1, 1], [], []>} : vector<4x96xf32>, vector<96x128xf32>, vector<4x128xf32> -> vector<4x128xf32>
    %63 = vector.broadcast %53 : vector<1x128xf32> to vector<4x128xf32>
    %64 = arith.addf %62, %63 : vector<4x128xf32>
    %65 = vector.broadcast %54 : vector<1x128xf32> to vector<4x128xf32>
    %66 = arith.mulf %64, %65 : vector<4x128xf32>
    %67 = vector.broadcast %55 : vector<1x128xf32> to vector<4x128xf32>
    %68 = arith.addf %66, %67 : vector<4x128xf32>
    %cst_31 = arith.constant 0.000000e+00 : f32
    %69 = vector.broadcast %cst_31 : f32 to vector<4x128xf32>
    %70 = arith.maximumf %68, %69 : vector<4x128xf32>
    %cst_32 = arith.constant dense<0.000000e+00> : vector<4x64xf32>
    %71 = tpu.matmul %70, %60, %cst_32 {dimension_numbers = #tpu.dot_dimension_numbers<[1], [0], [0], [1], [0, 0, 1, 1], [], []>} : vector<4x128xf32>, vector<128x64xf32>, vector<4x64xf32> -> vector<4x64xf32>
    %72 = vector.broadcast %56 : vector<1x64xf32> to vector<4x64xf32>
    %73 = arith.addf %71, %72 : vector<4x64xf32>
    %74 = vector.broadcast %57 : vector<1x64xf32> to vector<4x64xf32>
    %75 = arith.mulf %73, %74 : vector<4x64xf32>
    %76 = vector.broadcast %58 : vector<1x64xf32> to vector<4x64xf32>
    %77 = arith.addf %75, %76 : vector<4x64xf32>
    %cst_33 = arith.constant 0.000000e+00 : f32
    %78 = vector.broadcast %cst_33 : f32 to vector<4x64xf32>
    %79 = arith.maximumf %77, %78 : vector<4x64xf32>
    %cst_34 = arith.constant dense<0.000000e+00> : vector<4x128xf32>
    %80 = tpu.matmul %79, %61, %cst_34 {dimension_numbers = #tpu.dot_dimension_numbers<[1], [0], [0], [1], [0, 0, 1, 1], [], []>} : vector<4x64xf32>, vector<64x128xf32>, vector<4x128xf32> -> vector<4x128xf32>
    %81 = vector.broadcast %59 : vector<1x128xf32> to vector<4x128xf32>
    %82 = arith.addf %80, %81 : vector<4x128xf32>
    %c0_35 = arith.constant 0 : index
    %c0_36 = arith.constant 0 : index
    %83 = vector.load %arg4[%c0_35, %c0_36] : memref<4x128xf32, #tpu.memory_space<vmem>>, vector<4x128xf32>
    tpu.vector_store %arg4[%c0_35, %c0_36], %82 {strides = array<i32>} : memref<4x128xf32, #tpu.memory_space<vmem>>, vector<4x128xf32>,
    return
  }
}

</mosaic_0001>

<llo_original>
// kernel: tab_transformer_forward.1
$region0: #{tab_transformer_forward.1}
  #allocation0 [shape = 'u32[]', space=smem, size = 0x4, offset = 0x4, fixed_abs, tag = 'smem constant byte address 0x4 - core index']
  #allocation1 [shape = 'u32[144,128]{1,0:T(1,128)}', space=vmem, size = 0x12000, scoped, tag = 'internal scratch']
  %s0 = inlined_call_operand.vmem [shape: f32[4,8], index: 0, kind: input, shape index: {}]
  %s1 = inlined_call_operand.vmem [shape: f32[8,32], index: 1, kind: input, shape index: {}]
  %s2 = inlined_call_operand.hbm [shape: f32[3,232,128], index: 2, kind: input, shape index: {}]
  %s3 = inlined_call_operand.hbm [shape: f32[304,128], index: 3, kind: input, shape index: {}]
  %s4 = inlined_call_operand.hbm [shape: f32[4,128], index: 4, kind: output, shape index: {}]
  %s5 = sld [smem:[#allocation0]]
  $region41: #{tab_transformer_forward.1} parent=0
    _
  %s7 = ssub.s32 1, %s5
  %s8 = scalar_select 0, %s7, %s5
  $region1: #{tab_transformer_forward.1} parent=0
    #allocation2 [shape = 'u8[356352]{0}', space=vmem, size = 0x57000, scoped, tag = 'input window, operand 2, single buffered']
    #allocation3 [shape = 's32[1]{0}', space=sflag, size = 0x4, scoped, tag = 'scoped memory for tab_transformer_forward.1']
    #allocation4 [shape = 's32[1]{0}', space=sflag, size = 0x4, scoped, tag = 'scoped memory for tab_transformer_forward.1']
    #allocation5 [shape = 'u8[155648]{0}', space=vmem, size = 0x26000, scoped, tag = 'input window, operand 3, single buffered']
    #allocation6 [shape = 's32[1]{0}', space=sflag, size = 0x4, scoped, tag = 'scoped memory for tab_transformer_forward.1']
    #allocation7 [shape = 'u8[2048]{0}', space=vmem, size = 0x800, scoped, tag = 'output window, operand 0, single buffered']
    %9 = vsyncpa [#allocation3], 0
    %10 = vsyncpa [#allocation6], 0
    %11 = vsyncpa [#allocation4], 0
    // Predicated region
    $region2: #{tab_transformer_forward.1} parent=1 // pred_check
      _
    $region3: #{tab_transformer_forward.1} parent=1 // pred_check_branch
      %13 = sbr.rel (0) target = $region5
    $region4: #{tab_transformer_forward.1} parent=1 // pred_region
      _
    $region5: #{tab_transformer_forward.1} parent=1 // pred_fallthru
      _
    // Predicated region
    $region6: #{tab_transformer_forward.1} parent=1 // pred_check
      _
    $region7: #{tab_transformer_forward.1} parent=1 // pred_check_branch
      %15 = sbr.rel (0) target = $region9
    $region8: #{tab_transformer_forward.1} parent=1 // pred_region
      _
    $region9: #{tab_transformer_forward.1} parent=1 // pred_fallthru
      _
    // Predicated region
    $region10: #{tab_transformer_forward.1} parent=1 // pred_check
      _
    $region11: #{tab_transformer_forward.1} parent=1 // pred_check_branch
      %17 = sbr.rel (0) target = $region13
    $region12: #{tab_transformer_forward.1} parent=1 // pred_region
      %s19 = ssub.s32 11136, 11136
      %20 = vsyncadd [#allocation3], %s19
      %s21 = sshll.u32 [#allocation2], 4
      %s22 = int_to_ptr.vmem [resolvable:$true] %s21
      %27 = dma.hbm_to_vmem [thread:$0]  %s2, 11136, %s22, [#allocation3], 128, 128, 8
    $region13: #{tab_transformer_forward.1} parent=1 // pred_fallthru
      _
    // Predicated region
    $region14: #{tab_transformer_forward.1} parent=1 // pred_check
      _
    $region15: #{tab_transformer_forward.1} parent=1 // pred_check_branch
      %29 = sbr.rel (0) target = $region17
    $region16: #{tab_transformer_forward.1} parent=1 // pred_region
      %s31 = ssub.s32 4864, 4864
      %32 = vsyncadd [#allocation6], %s31
      %s33 = sshll.u32 [#allocation5], 4
      %s34 = int_to_ptr.vmem [resolvable:$true] %s33
      %39 = dma.hbm_to_vmem [thread:$0]  %s3, 4864, %s34, [#allocation6], 128, 128, 8
    $region17: #{tab_transformer_forward.1} parent=1 // pred_fallthru
      _
    // Predicated region
    $region18: #{tab_transformer_forward.1} parent=1 // pred_check
      _
    $region19: #{tab_transformer_forward.1} parent=1 // pred_check_branch
      %41 = sbr.rel (0) target = $region21
    $region20: #{tab_transformer_forward.1} parent=1 // pred_region
      %42 = dma.done [#allocation3], 11136
    $region21: #{tab_transformer_forward.1} parent=1 // pred_fallthru
      _
    // Predicated region
    $region22: #{tab_transformer_forward.1} parent=1 // pred_check
      _
    $region23: #{tab_transformer_forward.1} parent=1 // pred_check_branch
      %44 = sbr.rel (0) target = $region25
    $region24: #{tab_transformer_forward.1} parent=1 // pred_region
      %45 = dma.done [#allocation6], 4864
    $region25: #{tab_transformer_forward.1} parent=1 // pred_fallthru
      _
    %v46 = vld [vmem:[#allocation5 + $0x128] sm:$0xff]
    %v47 = vld [vmem:[#allocation5 + $0x67] sm:$0x1]
    %v48 = vld [vmem:[%s0] sm:$0xf]
    %v49 = vlaneseq
    %v50 = vshrl.u32 %v49, 7
    %v51 = vsub.s32 0, %v50
    %v52 = vrot.slane %v47, %v51
    %vm53 = vcmask 64512
    %v55 = vsel %vm53, %v48, 0
    %57 = vmatprep.subr.mxu0 0.0
    %58 = vmatpush1.msra.mxu0 %v46
    %59 = vmatprep.subr.mxu0 0.0
    %60 = vmatpush1.msra.mxu0 0.0
    %61 = vmatprep.subr.mxu0 0.0
    %62 = vmatpush1.msra.mxu0 0.0
    %63 = vmatprep.subr.mxu0 0.0
    %64 = vmatpush1.msra.mxu0 0.0
    %65 = vmatprep.subr.mxu0 0.0
    %66 = vmatpush1.msra.mxu0 0.0
    %67 = vmatprep.subr.mxu0 0.0
    %68 = vmatpush1.msra.mxu0 0.0
    %69 = vmatprep.subr.mxu0 0.0
    %70 = vmatpush1.msra.mxu0 0.0
    %71 = vmatprep.subr.mxu0 0.0
    %72 = vmatpush1.msra.mxu0 0.0
    %73 = vmatprep.subr.mxu0 0.0
    %74 = vmatpush1.msra.mxu0 0.0
    %75 = vmatprep.subr.mxu0 0.0
    %76 = vmatpush1.msra.mxu0 0.0
    %77 = vmatprep.subr.mxu0 0.0
    %78 = vmatpush1.msra.mxu0 0.0
    %79 = vmatprep.subr.mxu0 0.0
    %80 = vmatpush1.msra.mxu0 0.0
    %81 = vmatprep.subr.mxu0 0.0
    %82 = vmatpush1.msra.mxu0 0.0
    %83 = vmatprep.subr.mxu0 0.0
    %84 = vmatpush1.msra.mxu0 0.0
    %85 = vmatprep.subr.mxu0 0.0
    %86 = vmatpush1.msra.mxu0 0.0
    %87 = vmatprep.subr.mxu0 0.0
    %88 = vmatpush1.msra.mxu0 0.0
    %89 = vmatprep.subr.mxu0 0.0
    %90 = vmatpush1.msra.mxu0 0.0
    %91 = vmatprep.subr.mxu0 0.0
    %92 = vmatpush1.msra.mxu0 0.0
    %93 = vmatprep.subr.mxu0 0.0
    %94 = vmatpush1.msra.mxu0 0.0
    %95 = vmatprep.subr.mxu0 0.0
    %96 = vmatpush1.msra.mxu0 0.0
    %97 = vmatprep.subr.mxu0 0.0
    %98 = vmatpush1.msra.mxu0 0.0
    %99 = vmatprep.subr.mxu0 0.0
    %100 = vmatpush1.msra.mxu0 0.0
    %101 = vmatprep.subr.mxu0 0.0
    %102 = vmatpush1.msra.mxu0 0.0
    %103 = vmatprep.subr.mxu0 0.0
    %104 = vmatpush1.msra.mxu0 0.0
    %105 = vmatprep.subr.mxu0 0.0
    %106 = vmatpush1.msra.mxu0 0.0
    %107 = vmatprep.subr.mxu0 0.0
    %108 = vmatpush1.msra.mxu0 0.0
    %109 = vmatprep.subr.mxu0 0.0
    %110 = vmatpush1.msra.mxu0 0.0
    %111 = vmatprep.subr.mxu0 0.0
    %112 = vmatpush1.msra.mxu0 0.0
    %113 = vmatprep.subr.mxu0 0.0
    %114 = vmatpush1.msra.mxu0 0.0
    %115 = vmatprep.subr.mxu0 0.0
    %116 = vmatpush1.msra.mxu0 0.0
    %117 = vmatprep.subr.mxu0 0.0
    %118 = vmatpush1.msra.mxu0 0.0
    %119 = vmatprep.subr.mxu0 0.0
    %120 = vmatpush1.msra.mxu0 0.0
    %121 = vmatprep.mubr.f32.mxu0 0.0
    %122 = vmatmul.mubr.f32.gmra.mrb[0].mxu0 %v55
    %v123 = vpop.f32.mrb[0].mxu0
    %v124 = vadd.f32 %v52, %v123
    %v125 = vpop.f32.mrb[0].mxu0
    %126 = vdwg.mxu0
    %v127 = vld [vmem:[%s1] sm:$0xff]
    %v129 = vrot.slane %v127, 4
    %vm131 = vcmask 1043456
    %v132 = vsel %vm131, %v124, %v129
    %v133 = vlaneseq
    %v134 = vshrl.u32 %v133, 7
    %v135 = vadd.s32 %v134, 8
    %vm136 = vcmp.lt.s32.totalorder %v134, 0
    %v137 = vsub.s32 0, %v134
    %v138 = vsel %vm136, %v137, %v134
    %v139 = vshrl.u32 %v138, 2
    %v140 = vand.u32 %v138, 3
    %v141 = vsub.s32 0, %v140
    %v142 = vsel %vm136, %v141, %v140
    %vm143 = vcmp.lt.s32.totalorder %v135, 0
    %v144 = vsub.s32 0, %v135
    %v145 = vsel %vm143, %v144, %v135
    %v146 = vshrl.u32 %v145, 2
    %v147 = vand.u32 %v145, 3
    %v148 = vsub.s32 0, %v147
    %v149 = vsel %vm143, %v148, %v147
    %vm150 = vcmp.ne.s32.totalorder %v142, 0
    %vm151 = vcmp.ne.s32.totalorder %v149, 0
    %vm152 = vcmp.lt.s32.totalorder %v142, 0
    %vm153 = vcmp.lt.s32.totalorder %v149, 0
    %vm154 = vmand %vm152, %vm150
    %vm155 = vmand %vm153, %vm151
    %v156 = vadd.s32 %v142, 4
    %v157 = vadd.s32 %v149, 4
    %v158 = vsel %vm154, %v156, %v142
    %v159 = vsel %vm155, %v157, %v149
    %v160 = vlaneseq
    %v161 = vand.u32 %v160, 127
    %vm162 = vcmp.lt.s32.totalorder %v161, 0
    %v163 = vsub.s32 0, %v161
    %v164 = vsel %vm162, %v163, %v161
    %v165 = vshrl.u32 %v164, 2
    %v166 = vand.u32 %v164, 3
    %v167 = vsub.s32 0, %v166
    %v168 = vsel %vm162, %v167, %v166
    %vm169 = vcmp.ne.s32.totalorder %v168, 0
    %vm170 = vcmp.lt.s32.totalorder %v168, 0
    %vm171 = vmand %vm170, %vm169
    %v172 = vadd.s32 %v168, 4
    %v173 = vsel %vm171, %v172, %v168
    %vm174 = vcmp.eq.s32.totalorder %v158, %v173
    %vm175 = vcmp.eq.s32.totalorder %v159, %v173
    %v176 = vsel %vm174, 0.0, -1e+09
    %v177 = vsel %vm175, 0.0, -1e+09
    loop: start=0, step=1, limit=3
    $region26: #{tab_transformer_forward.1} parent=1 // loop_pre_header
      _
    $region27: #{tab_transformer_forward.1} parent=1 // loop_header
      %s179 = sphi 0, %s183
      %p180 = scmp.ge.s32.totalorder %s179, 3
      %v184 = vphi %v132, %v1493
      %v185 = vphi %v129, %v1494
    $region28: #{tab_transformer_forward.1} parent=1 // loop_header_branch
      %182 = sbr.rel (%p180) target = $region32
    $region29: #{tab_transformer_forward.1} parent=1 // loop_body
      %s186 = smul.u32 %s179, 232
      %s187 = scalar_lea.vmem [#allocation2], %s186
      %v188 = vld [vmem:[%s187] sm:$0xff]
      %v189 = vld [vmem:[%s187 + $0x8] sm:$0xff]
      %v190 = vld [vmem:[%s187 + $0x10] sm:$0xff]
      %v191 = vld [vmem:[%s187 + $0x18] sm:$0xff]
      %v192 = vld [vmem:[%s187 + $0x28] sm:$0xff]
      %v193 = vld [vmem:[%s187 + $0x30] sm:$0xff]
      %v194 = vld [vmem:[%s187 + $0x38] sm:$0xff]
      %v195 = vld [vmem:[%s187 + $0x40] sm:$0xff]
      %v196 = vld [vmem:[%s187 + $0x48] sm:$0xff]
      %v197 = vld [vmem:[%s187 + $0x50] sm:$0xff]
      %v198 = vld [vmem:[%s187 + $0x58] sm:$0xff]
      %v199 = vld [vmem:[%s187 + $0x60] sm:$0xff]
      %v200 = vld [vmem:[%s187 + $0x68] sm:$0xff]
      %v201 = vld [vmem:[%s187 + $0x70] sm:$0xff]
      %v202 = vld [vmem:[%s187 + $0x78] sm:$0xff]
      %v203 = vld [vmem:[%s187 + $0x80] sm:$0xff]
      %v204 = vld [vmem:[%s187 + $0x88] sm:$0xff]
      %v205 = vld [vmem:[%s187 + $0x90] sm:$0xff]
      %v206 = vld [vmem:[%s187 + $0x98] sm:$0xff]
      %v207 = vld [vmem:[%s187 + $0xa0] sm:$0xff]
      %v208 = vld [vmem:[%s187 + $0xa8] sm:$0xff]
      %v209 = vld [vmem:[%s187 + $0xb0] sm:$0xff]
      %v210 = vld [vmem:[%s187 + $0xb8] sm:$0xff]
      %v211 = vld [vmem:[%s187 + $0xc0] sm:$0xff]
      %v212 = vld [vmem:[%s187 + $0xc8] sm:$0xff]
      %v213 = vld [vmem:[%s187 + $0xd0] sm:$0xff]
      %v214 = vld [vmem:[%s187 + $0xd8] sm:$0xff]
      %v215 = vld [vmem:[%s187 + $0xe0] sm:$0xff]
      %v216 = vld [vmem:[%s187 + $0x20] sm:$0x1]
      %v217 = vld [vmem:[%s187 + $0x21] sm:$0x1]
      %v218 = vld [vmem:[%s187 + $0x22] sm:$0x1]
      %v219 = vld [vmem:[%s187 + $0x23] sm:$0x1]
      %v220 = vld [vmem:[%s187 + $0x24] sm:$0x1]
      %v221 = vld [vmem:[%s187 + $0x25] sm:$0x1]
      %v222 = vld [vmem:[%s187 + $0x26] sm:$0x1]
      %v223 = vld [vmem:[%s187 + $0x27] sm:$0x1]
      %v224 = vlaneseq
      %v225 = vshrl.u32 %v224, 7
      %v226 = vsub.s32 0, %v225
      %v227 = vrot.slane %v216, %v226
      %vm228 = vcmask 261120
      %v230 = vsel %vm228, %v184, 0
      %v233 = vsel %vm228, %v185, 0
      %235 = vmatprep.subr.mxu0 0.0
      %236 = vmatpush1.msra.mxu0 %v188
      %237 = vmatprep.subr.mxu0 0.0
      %238 = vmatpush1.msra.mxu0 %v189
      %239 = vmatprep.subr.mxu0 0.0
      %240 = vmatpush1.msra.mxu0 %v190
      %241 = vmatprep.subr.mxu0 0.0
      %242 = vmatpush1.msra.mxu0 %v191
      %243 = vmatprep.subr.mxu0 0.0
      %244 = vmatpush1.msra.mxu0 0.0
      %245 = vmatprep.subr.mxu0 0.0
      %246 = vmatpush1.msra.mxu0 0.0
      %247 = vmatprep.subr.mxu0 0.0
      %248 = vmatpush1.msra.mxu0 0.0
      %249 = vmatprep.subr.mxu0 0.0
      %250 = vmatpush1.msra.mxu0 0.0
      %251 = vmatprep.subr.mxu0 0.0
      %252 = vmatpush1.msra.mxu0 0.0
      %253 = vmatprep.subr.mxu0 0.0
      %254 = vmatpush1.msra.mxu0 0.0
      %255 = vmatprep.subr.mxu0 0.0
      %256 = vmatpush1.msra.mxu0 0.0
      %257 = vmatprep.subr.mxu0 0.0
      %258 = vmatpush1.msra.mxu0 0.0
      %259 = vmatprep.subr.mxu0 0.0
      %260 = vmatpush1.msra.mxu0 0.0
      %261 = vmatprep.subr.mxu0 0.0
      %262 = vmatpush1.msra.mxu0 0.0
      %263 = vmatprep.subr.mxu0 0.0
      %264 = vmatpush1.msra.mxu0 0.0
      %265 = vmatprep.subr.mxu0 0.0
      %266 = vmatpush1.msra.mxu0 0.0
      %267 = vmatprep.subr.mxu0 0.0
      %268 = vmatpush1.msra.mxu0 0.0
      %269 = vmatprep.subr.mxu0 0.0
      %270 = vmatpush1.msra.mxu0 0.0
      %271 = vmatprep.subr.mxu0 0.0
      %272 = vmatpush1.msra.mxu0 0.0
      %273 = vmatprep.subr.mxu0 0.0
      %274 = vmatpush1.msra.mxu0 0.0
      %275 = vmatprep.subr.mxu0 0.0
      %276 = vmatpush1.msra.mxu0 0.0
      %277 = vmatprep.subr.mxu0 0.0
      %278 = vmatpush1.msra.mxu0 0.0
      %279 = vmatprep.subr.mxu0 0.0
      %280 = vmatpush1.msra.mxu0 0.0
      %281 = vmatprep.subr.mxu0 0.0
      %282 = vmatpush1.msra.mxu0 0.0
      %283 = vmatprep.subr.mxu0 0.0
      %284 = vmatpush1.msra.mxu0 0.0
      %285 = vmatprep.subr.mxu0 0.0
      %286 = vmatpush1.msra.mxu0 0.0
      %287 = vmatprep.subr.mxu0 0.0
      %288 = vmatpush1.msra.mxu0 0.0
      %289 = vmatprep.subr.mxu0 0.0
      %290 = vmatpush1.msra.mxu0 0.0
      %291 = vmatprep.subr.mxu0 0.0
      %292 = vmatpush1.msra.mxu0 0.0
      %293 = vmatprep.subr.mxu0 0.0
      %294 = vmatpush1.msra.mxu0 0.0
      %295 = vmatprep.subr.mxu0 0.0
      %296 = vmatpush1.msra.mxu0 0.0
      %297 = vmatprep.subr.mxu0 0.0
      %298 = vmatpush1.msra.mxu0 0.0
      %299 = vmatprep.mubr.f32.mxu0 0.0
      %300 = vmatmul.mubr.f32.gmra.mrb[0].mxu0 %v230
      %v301 = vpop.f32.mrb[0].mxu0
      %v302 = vadd.f32 %v227, %v301
      %v303 = vpop.f32.mrb[0].mxu0
      %304 = vmatprep.mubr.f32.mxu0 0.0
      %305 = vmatmul.mubr.f32.gmra.mrb[0].mxu0 %v233
      %v306 = vpop.f32.mrb[0].mxu0
      %v307 = vadd.f32 %v227, %v306
      %v308 = vpop.f32.mrb[0].mxu0
      %309 = vdwg.mxu0
      %312 = vrot.lane.b32.xlu0 %v302, 96
      %v313 = vpop.permute.xlu0 %312
      %314 = vrot.lane.b32.xlu0 %v307, 96
      %v315 = vpop.permute.xlu0 %314
      %v316 = vsel %vm53, %v302, 0
      %v318 = vsel %vm53, %v307, 0
      %v320 = vsel %vm53, %v313, 0
      %v322 = vsel %vm53, %v315, 0
      %324 = vmatprep.subr.mxu0 0.0
      %325 = vmatpush1.xpose.msra.mxu0 %v320
      %326 = vmatprep.subr.mxu0 0.0
      %327 = vmatpush1.xpose.msra.mxu0 %v322
      %328 = vmatprep.subr.mxu0 0.0
      %329 = vmatpush1.xpose.msra.mxu0 0.0
      %330 = vmatprep.subr.mxu0 0.0
      %331 = vmatpush1.xpose.msra.mxu0 0.0
      %332 = vmatprep.subr.mxu0 0.0
      %333 = vmatpush1.xpose.msra.mxu0 0.0
      %334 = vmatprep.subr.mxu0 0.0
      %335 = vmatpush1.xpose.msra.mxu0 0.0
      %336 = vmatprep.subr.mxu0 0.0
      %337 = vmatpush1.xpose.msra.mxu0 0.0
      %338 = vmatprep.subr.mxu0 0.0
      %339 = vmatpush1.xpose.msra.mxu0 0.0
      %340 = vmatprep.subr.mxu0 0.0
      %341 = vmatpush1.xpose.msra.mxu0 0.0
      %342 = vmatprep.subr.mxu0 0.0
      %343 = vmatpush1.xpose.msra.mxu0 0.0
      %344 = vmatprep.subr.mxu0 0.0
      %345 = vmatpush1.xpose.msra.mxu0 0.0
      %346 = vmatprep.subr.mxu0 0.0
      %347 = vmatpush1.xpose.msra.mxu0 0.0
      %348 = vmatprep.subr.mxu0 0.0
      %349 = vmatpush1.xpose.msra.mxu0 0.0
      %350 = vmatprep.subr.mxu0 0.0
      %351 = vmatpush1.xpose.msra.mxu0 0.0
      %352 = vmatprep.subr.mxu0 0.0
      %353 = vmatpush1.xpose.msra.mxu0 0.0
      %354 = vmatprep.subr.mxu0 0.0
      %355 = vmatpush1.xpose.msra.mxu0 0.0
      %356 = vmatprep.subr.mxu0 0.0
      %357 = vmatpush1.xpose.msra.mxu0 0.0
      %358 = vmatprep.subr.mxu0 0.0
      %359 = vmatpush1.xpose.msra.mxu0 0.0
      %360 = vmatprep.subr.mxu0 0.0
      %361 = vmatpush1.xpose.msra.mxu0 0.0
      %362 = vmatprep.subr.mxu0 0.0
      %363 = vmatpush1.xpose.msra.mxu0 0.0
      %364 = vmatprep.subr.mxu0 0.0
      %365 = vmatpush1.xpose.msra.mxu0 0.0
      %366 = vmatprep.subr.mxu0 0.0
      %367 = vmatpush1.xpose.msra.mxu0 0.0
      %368 = vmatprep.subr.mxu0 0.0
      %369 = vmatpush1.xpose.msra.mxu0 0.0
      %370 = vmatprep.subr.mxu0 0.0
      %371 = vmatpush1.xpose.msra.mxu0 0.0
      %372 = vmatprep.subr.mxu0 0.0
      %373 = vmatpush1.xpose.msra.mxu0 0.0
      %374 = vmatprep.subr.mxu0 0.0
      %375 = vmatpush1.xpose.msra.mxu0 0.0
      %376 = vmatprep.subr.mxu0 0.0
      %377 = vmatpush1.xpose.msra.mxu0 0.0
      %378 = vmatprep.subr.mxu0 0.0
      %379 = vmatpush1.xpose.msra.mxu0 0.0
      %380 = vmatprep.subr.mxu0 0.0
      %381 = vmatpush1.xpose.msra.mxu0 0.0
      %382 = vmatprep.subr.mxu0 0.0
      %383 = vmatpush1.xpose.msra.mxu0 0.0
      %384 = vmatprep.subr.mxu0 0.0
      %385 = vmatpush1.xpose.msra.mxu0 0.0
      %386 = vmatprep.subr.mxu0 0.0
      %387 = vmatpush1.xpose.msra.mxu0 0.0
      %388 = vmatprep.mubr.f32.mxu0 0.0
      %389 = vmatmul.mubr.f32.gmra.mrb[0].mxu0 %v316
      %v390 = vpop.f32.mrb[0].mxu0
      %v391 = vadd.f32 0.0, %v390
      %v392 = vpop.f32.mrb[0].mxu0
      %393 = vmatprep.mubr.f32.mxu0 0.0
      %394 = vmatmul.mubr.f32.gmra.mrb[0].mxu0 %v318
      %v395 = vpop.f32.mrb[0].mxu0
      %v396 = vadd.f32 0.0, %v395
      %v397 = vpop.f32.mrb[0].mxu0
      %398 = vdwg.mxu0
      %v399 = vmul.f32 %v391, 0.35355338
      %v400 = vmul.f32 %v396, 0.35355338
      %v401 = vadd.f32 %v399, %v176
      %v402 = vadd.f32 %v400, %v177
      %vm403 = vcmask 97280
      %v404 = vsel %vm403, %v401, -inf
      %405 = vmax.xlane.f32.xlu0 %v404
      %v406 = vpop.xlane.xlu0 %405
      %vm407 = vcmask 93184
      %v408 = vsel %vm407, %v402, -inf
      %409 = vmax.xlane.f32.xlu0 %v408
      %v410 = vpop.xlane.xlu0 %409
      %v411 = vsub.f32 %v401, %v406
      %v412 = vsub.f32 %v402, %v410
      %v413 = vmul.f32 %v411, 1.442695
      %v414 = vpow.pop %v413
      %v415 = vmul.f32 %v412, 1.442695
      %v416 = vpow.pop %v415
      %v417 = vsel %vm403, %v414, 0.0
      %418 = vadd.xlane.f32.xlu0 %v417
      %v419 = vpop.xlane.xlu0 %418
      %v420 = vsel %vm407, %v416, 0.0
      %421 = vadd.xlane.f32.xlu0 %v420
      %v422 = vpop.xlane.xlu0 %421
      %v423 = vrcp.pop %v419
      %v424 = vrcp.pop %v422
      %v425 = vmul.f32 %v414, %v423
      %v426 = vmul.f32 %v416, %v424
      %427 = vrot.lane.b32.xlu0 %v302, 64
      %v428 = vpop.permute.xlu0 %427
      %429 = vrot.lane.b32.xlu0 %v307, 64
      %v430 = vpop.permute.xlu0 %429
      %v433 = vsel %vm403, %v425, 0
      %v436 = vsel %vm403, %v426, 0
      %v438 = vsel %vm131, %v430, 0
      %440 = vmatprep.subr.mxu0 0.0
      %441 = vmatpush1.msra.mxu0 %v428
      %442 = vmatprep.subr.mxu0 0.0
      %443 = vmatpush1.msra.mxu0 %v438
      %444 = vmatprep.subr.mxu0 0.0
      %445 = vmatpush1.msra.mxu0 0.0
      %446 = vmatprep.subr.mxu0 0.0
      %447 = vmatpush1.msra.mxu0 0.0
      %448 = vmatprep.subr.mxu0 0.0
      %449 = vmatpush1.msra.mxu0 0.0
      %450 = vmatprep.subr.mxu0 0.0
      %451 = vmatpush1.msra.mxu0 0.0
      %452 = vmatprep.subr.mxu0 0.0
      %453 = vmatpush1.msra.mxu0 0.0
      %454 = vmatprep.subr.mxu0 0.0
      %455 = vmatpush1.msra.mxu0 0.0
      %456 = vmatprep.subr.mxu0 0.0
      %457 = vmatpush1.msra.mxu0 0.0
      %458 = vmatprep.subr.mxu0 0.0
      %459 = vmatpush1.msra.mxu0 0.0
      %460 = vmatprep.subr.mxu0 0.0
      %461 = vmatpush1.msra.mxu0 0.0
      %462 = vmatprep.subr.mxu0 0.0
      %463 = vmatpush1.msra.mxu0 0.0
      %464 = vmatprep.subr.mxu0 0.0
      %465 = vmatpush1.msra.mxu0 0.0
      %466 = vmatprep.subr.mxu0 0.0
      %467 = vmatpush1.msra.mxu0 0.0
      %468 = vmatprep.subr.mxu0 0.0
      %469 = vmatpush1.msra.mxu0 0.0
      %470 = vmatprep.subr.mxu0 0.0
      %471 = vmatpush1.msra.mxu0 0.0
      %472 = vmatprep.subr.mxu0 0.0
      %473 = vmatpush1.msra.mxu0 0.0
      %474 = vmatprep.subr.mxu0 0.0
      %475 = vmatpush1.msra.mxu0 0.0
      %476 = vmatprep.subr.mxu0 0.0
      %477 = vmatpush1.msra.mxu0 0.0
      %478 = vmatprep.subr.mxu0 0.0
      %479 = vmatpush1.msra.mxu0 0.0
      %480 = vmatprep.subr.mxu0 0.0
      %481 = vmatpush1.msra.mxu0 0.0
      %482 = vmatprep.subr.mxu0 0.0
      %483 = vmatpush1.msra.mxu0 0.0
      %484 = vmatprep.subr.mxu0 0.0
      %485 = vmatpush1.msra.mxu0 0.0
      %486 = vmatprep.subr.mxu0 0.0
      %487 = vmatpush1.msra.mxu0 0.0
      %488 = vmatprep.subr.mxu0 0.0
      %489 = vmatpush1.msra.mxu0 0.0
      %490 = vmatprep.subr.mxu0 0.0
      %491 = vmatpush1.msra.mxu0 0.0
      %492 = vmatprep.subr.mxu0 0.0
      %493 = vmatpush1.msra.mxu0 0.0
      %494 = vmatprep.subr.mxu0 0.0
      %495 = vmatpush1.msra.mxu0 0.0
      %496 = vmatprep.subr.mxu0 0.0
      %497 = vmatpush1.msra.mxu0 0.0
      %498 = vmatprep.subr.mxu0 0.0
      %499 = vmatpush1.msra.mxu0 0.0
      %500 = vmatprep.subr.mxu0 0.0
      %501 = vmatpush1.msra.mxu0 0.0
      %502 = vmatprep.subr.mxu0 0.0
      %503 = vmatpush1.msra.mxu0 0.0
      %504 = vmatprep.mubr.f32.mxu0 0.0
      %505 = vmatmul.mubr.f32.gmra.mrb[0].mxu0 %v433
      %v506 = vpop.f32.mrb[0].mxu0
      %v507 = vadd.f32 0.0, %v506
      %v508 = vpop.f32.mrb[0].mxu0
      %509 = vmatprep.mubr.f32.mxu0 0.0
      %510 = vmatmul.mubr.f32.gmra.mrb[0].mxu0 %v436
      %v511 = vpop.f32.mrb[0].mxu0
      %v512 = vadd.f32 0.0, %v511
      %v513 = vpop.f32.mrb[0].mxu0
      %514 = vdwg.mxu0
      %515 = vrot.lane.b32.xlu0 %v302, 120
      %v516 = vpop.permute.xlu0 %515
      %517 = vrot.lane.b32.xlu0 %v307, 120
      %v518 = vpop.permute.xlu0 %517
      %519 = vrot.lane.b32.xlu0 %v302, 88
      %v520 = vpop.permute.xlu0 %519
      %521 = vrot.lane.b32.xlu0 %v307, 88
      %v522 = vpop.permute.xlu0 %521
      %v523 = vsel %vm53, %v516, 0
      %v525 = vsel %vm53, %v518, 0
      %v527 = vsel %vm53, %v520, 0
      %v529 = vsel %vm53, %v522, 0
      %531 = vmatprep.subr.mxu0 0.0
      %532 = vmatpush1.xpose.msra.mxu0 %v527
      %533 = vmatprep.subr.mxu0 0.0
      %534 = vmatpush1.xpose.msra.mxu0 %v529
      %535 = vmatprep.subr.mxu0 0.0
      %536 = vmatpush1.xpose.msra.mxu0 0.0
      %537 = vmatprep.subr.mxu0 0.0
      %538 = vmatpush1.xpose.msra.mxu0 0.0
      %539 = vmatprep.subr.mxu0 0.0
      %540 = vmatpush1.xpose.msra.mxu0 0.0
      %541 = vmatprep.subr.mxu0 0.0
      %542 = vmatpush1.xpose.msra.mxu0 0.0
      %543 = vmatprep.subr.mxu0 0.0
      %544 = vmatpush1.xpose.msra.mxu0 0.0
      %545 = vmatprep.subr.mxu0 0.0
      %546 = vmatpush1.xpose.msra.mxu0 0.0
      %547 = vmatprep.subr.mxu0 0.0
      %548 = vmatpush1.xpose.msra.mxu0 0.0
      %549 = vmatprep.subr.mxu0 0.0
      %550 = vmatpush1.xpose.msra.mxu0 0.0
      %551 = vmatprep.subr.mxu0 0.0
      %552 = vmatpush1.xpose.msra.mxu0 0.0
      %553 = vmatprep.subr.mxu0 0.0
      %554 = vmatpush1.xpose.msra.mxu0 0.0
      %555 = vmatprep.subr.mxu0 0.0
      %556 = vmatpush1.xpose.msra.mxu0 0.0
      %557 = vmatprep.subr.mxu0 0.0
      %558 = vmatpush1.xpose.msra.mxu0 0.0
      %559 = vmatprep.subr.mxu0 0.0
      %560 = vmatpush1.xpose.msra.mxu0 0.0
      %561 = vmatprep.subr.mxu0 0.0
      %562 = vmatpush1.xpose.msra.mxu0 0.0
      %563 = vmatprep.subr.mxu0 0.0
      %564 = vmatpush1.xpose.msra.mxu0 0.0
      %565 = vmatprep.subr.mxu0 0.0
      %566 = vmatpush1.xpose.msra.mxu0 0.0
      %567 = vmatprep.subr.mxu0 0.0
      %568 = vmatpush1.xpose.msra.mxu0 0.0
      %569 = vmatprep.subr.mxu0 0.0
      %570 = vmatpush1.xpose.msra.mxu0 0.0
      %571 = vmatprep.subr.mxu0 0.0
      %572 = vmatpush1.xpose.msra.mxu0 0.0
      %573 = vmatprep.subr.mxu0 0.0
      %574 = vmatpush1.xpose.msra.mxu0 0.0
      %575 = vmatprep.subr.mxu0 0.0
      %576 = vmatpush1.xpose.msra.mxu0 0.0
      %577 = vmatprep.subr.mxu0 0.0
      %578 = vmatpush1.xpose.msra.mxu0 0.0
      %579 = vmatprep.subr.mxu0 0.0
      %580 = vmatpush1.xpose.msra.mxu0 0.0
      %581 = vmatprep.subr.mxu0 0.0
      %582 = vmatpush1.xpose.msra.mxu0 0.0
      %583 = vmatprep.subr.mxu0 0.0
      %584 = vmatpush1.xpose.msra.mxu0 0.0
      %585 = vmatprep.subr.mxu0 0.0
      %586 = vmatpush1.xpose.msra.mxu0 0.0
      %587 = vmatprep.subr.mxu0 0.0
      %588 = vmatpush1.xpose.msra.mxu0 0.0
      %589 = vmatprep.subr.mxu0 0.0
      %590 = vmatpush1.xpose.msra.mxu0 0.0
      %591 = vmatprep.subr.mxu0 0.0
      %592 = vmatpush1.xpose.msra.mxu0 0.0
      %593 = vmatprep.subr.mxu0 0.0
      %594 = vmatpush1.xpose.msra.mxu0 0.0
      %595 = vmatprep.mubr.f32.mxu0 0.0
      %596 = vmatmul.mubr.f32.gmra.mrb[0].mxu0 %v523
      %v597 = vpop.f32.mrb[0].mxu0
      %v598 = vadd.f32 0.0, %v597
      %v599 = vpop.f32.mrb[0].mxu0
      %600 = vmatprep.mubr.f32.mxu0 0.0
      %601 = vmatmul.mubr.f32.gmra.mrb[0].mxu0 %v525
      %v602 = vpop.f32.mrb[0].mxu0
      %v603 = vadd.f32 0.0, %v602
      %v604 = vpop.f32.mrb[0].mxu0
      %605 = vdwg.mxu0
      %v606 = vmul.f32 %v598, 0.35355338
      %v607 = vmul.f32 %v603, 0.35355338
      %v608 = vadd.f32 %v606, %v176
      %v609 = vadd.f32 %v607, %v177
      %v610 = vsel %vm403, %v608, -inf
      %611 = vmax.xlane.f32.xlu0 %v610
      %v612 = vpop.xlane.xlu0 %611
      %v613 = vsel %vm407, %v609, -inf
      %614 = vmax.xlane.f32.xlu0 %v613
      %v615 = vpop.xlane.xlu0 %614
      %v616 = vsub.f32 %v608, %v612
      %v617 = vsub.f32 %v609, %v615
      %v618 = vmul.f32 %v616, 1.442695
      %v619 = vpow.pop %v618
      %v620 = vmul.f32 %v617, 1.442695
      %v621 = vpow.pop %v620
      %v622 = vsel %vm403, %v619, 0.0
      %623 = vadd.xlane.f32.xlu0 %v622
      %v624 = vpop.xlane.xlu0 %623
      %v625 = vsel %vm407, %v621, 0.0
      %626 = vadd.xlane.f32.xlu0 %v625
      %v627 = vpop.xlane.xlu0 %626
      %v628 = vrcp.pop %v624
      %v629 = vrcp.pop %v627
      %v630 = vmul.f32 %v619, %v628
      %v631 = vmul.f32 %v621, %v629
      %632 = vrot.lane.b32.xlu0 %v302, 56
      %v633 = vpop.permute.xlu0 %632
      %634 = vrot.lane.b32.xlu0 %v307, 56
      %v635 = vpop.permute.xlu0 %634
      %v638 = vsel %vm403, %v630, 0
      %v641 = vsel %vm403, %v631, 0
      %v643 = vsel %vm131, %v635, 0
      %645 = vmatprep.subr.mxu0 0.0
      %646 = vmatpush1.msra.mxu0 %v633
      %647 = vmatprep.subr.mxu0 0.0
      %648 = vmatpush1.msra.mxu0 %v643
      %649 = vmatprep.subr.mxu0 0.0
      %650 = vmatpush1.msra.mxu0 0.0
      %651 = vmatprep.subr.mxu0 0.0
      %652 = vmatpush1.msra.mxu0 0.0
      %653 = vmatprep.subr.mxu0 0.0
      %654 = vmatpush1.msra.mxu0 0.0
      %655 = vmatprep.subr.mxu0 0.0
      %656 = vmatpush1.msra.mxu0 0.0
      %657 = vmatprep.subr.mxu0 0.0
      %658 = vmatpush1.msra.mxu0 0.0
      %659 = vmatprep.subr.mxu0 0.0
      %660 = vmatpush1.msra.mxu0 0.0
      %661 = vmatprep.subr.mxu0 0.0
      %662 = vmatpush1.msra.mxu0 0.0
      %663 = vmatprep.subr.mxu0 0.0
      %664 = vmatpush1.msra.mxu0 0.0
      %665 = vmatprep.subr.mxu0 0.0
      %666 = vmatpush1.msra.mxu0 0.0
      %667 = vmatprep.subr.mxu0 0.0
      %668 = vmatpush1.msra.mxu0 0.0
      %669 = vmatprep.subr.mxu0 0.0
      %670 = vmatpush1.msra.mxu0 0.0
      %671 = vmatprep.subr.mxu0 0.0
      %672 = vmatpush1.msra.mxu0 0.0
      %673 = vmatprep.subr.mxu0 0.0
      %674 = vmatpush1.msra.mxu0 0.0
      %675 = vmatprep.subr.mxu0 0.0
      %676 = vmatpush1.msra.mxu0 0.0
      %677 = vmatprep.subr.mxu0 0.0
      %678 = vmatpush1.msra.mxu0 0.0
      %679 = vmatprep.subr.mxu0 0.0
      %680 = vmatpush1.msra.mxu0 0.0
      %681 = vmatprep.subr.mxu0 0.0
      %682 = vmatpush1.msra.mxu0 0.0
      %683 = vmatprep.subr.mxu0 0.0
      %684 = vmatpush1.msra.mxu0 0.0
      %685 = vmatprep.subr.mxu0 0.0
      %686 = vmatpush1.msra.mxu0 0.0
      %687 = vmatprep.subr.mxu0 0.0
      %688 = vmatpush1.msra.mxu0 0.0
      %689 = vmatprep.subr.mxu0 0.0
      %690 = vmatpush1.msra.mxu0 0.0
      %691 = vmatprep.subr.mxu0 0.0
      %692 = vmatpush1.msra.mxu0 0.0
      %693 = vmatprep.subr.mxu0 0.0
      %694 = vmatpush1.msra.mxu0 0.0
      %695 = vmatprep.subr.mxu0 0.0
      %696 = vmatpush1.msra.mxu0 0.0
      %697 = vmatprep.subr.mxu0 0.0
      %698 = vmatpush1.msra.mxu0 0.0
      %699 = vmatprep.subr.mxu0 0.0
      %700 = vmatpush1.msra.mxu0 0.0
      %701 = vmatprep.subr.mxu0 0.0
      %702 = vmatpush1.msra.mxu0 0.0
      %703 = vmatprep.subr.mxu0 0.0
      %704 = vmatpush1.msra.mxu0 0.0
      %705 = vmatprep.subr.mxu0 0.0
      %706 = vmatpush1.msra.mxu0 0.0
      %707 = vmatprep.subr.mxu0 0.0
      %708 = vmatpush1.msra.mxu0 0.0
      %709 = vmatprep.mubr.f32.mxu0 0.0
      %710 = vmatmul.mubr.f32.gmra.mrb[0].mxu0 %v638
      %v711 = vpop.f32.mrb[0].mxu0
      %v712 = vadd.f32 0.0, %v711
      %v713 = vpop.f32.mrb[0].mxu0
      %714 = vmatprep.mubr.f32.mxu0 0.0
      %715 = vmatmul.mubr.f32.gmra.mrb[0].mxu0 %v641
      %v716 = vpop.f32.mrb[0].mxu0
      %v717 = vadd.f32 0.0, %v716
      %v718 = vpop.f32.mrb[0].mxu0
      %719 = vdwg.mxu0
      %720 = vrot.lane.b32.xlu0 %v302, 112
      %v721 = vpop.permute.xlu0 %720
      %722 = vrot.lane.b32.xlu0 %v307, 112
      %v723 = vpop.permute.xlu0 %722
      %724 = vrot.lane.b32.xlu0 %v302, 80
      %v725 = vpop.permute.xlu0 %724
      %726 = vrot.lane.b32.xlu0 %v307, 80
      %v727 = vpop.permute.xlu0 %726
      %v728 = vsel %vm53, %v721, 0
      %v730 = vsel %vm53, %v723, 0
      %v732 = vsel %vm53, %v725, 0
      %v734 = vsel %vm53, %v727, 0
      %736 = vmatprep.subr.mxu0 0.0
      %737 = vmatpush1.xpose.msra.mxu0 %v732
      %738 = vmatprep.subr.mxu0 0.0
      %739 = vmatpush1.xpose.msra.mxu0 %v734
      %740 = vmatprep.subr.mxu0 0.0
      %741 = vmatpush1.xpose.msra.mxu0 0.0
      %742 = vmatprep.subr.mxu0 0.0
      %743 = vmatpush1.xpose.msra.mxu0 0.0
      %744 = vmatprep.subr.mxu0 0.0
      %745 = vmatpush1.xpose.msra.mxu0 0.0
      %746 = vmatprep.subr.mxu0 0.0
      %747 = vmatpush1.xpose.msra.mxu0 0.0
      %748 = vmatprep.subr.mxu0 0.0
      %749 = vmatpush1.xpose.msra.mxu0 0.0
      %750 = vmatprep.subr.mxu0 0.0
      %751 = vmatpush1.xpose.msra.mxu0 0.0
      %752 = vmatprep.subr.mxu0 0.0
      %753 = vmatpush1.xpose.msra.mxu0 0.0
      %754 = vmatprep.subr.mxu0 0.0
      %755 = vmatpush1.xpose.msra.mxu0 0.0
      %756 = vmatprep.subr.mxu0 0.0
      %757 = vmatpush1.xpose.msra.mxu0 0.0
      %758 = vmatprep.subr.mxu0 0.0
      %759 = vmatpush1.xpose.msra.mxu0 0.0
      %760 = vmatprep.subr.mxu0 0.0
      %761 = vmatpush1.xpose.msra.mxu0 0.0
      %762 = vmatprep.subr.mxu0 0.0
      %763 = vmatpush1.xpose.msra.mxu0 0.0
      %764 = vmatprep.subr.mxu0 0.0
      %765 = vmatpush1.xpose.msra.mxu0 0.0
      %766 = vmatprep.subr.mxu0 0.0
      %767 = vmatpush1.xpose.msra.mxu0 0.0
      %768 = vmatprep.subr.mxu0 0.0
      %769 = vmatpush1.xpose.msra.mxu0 0.0
      %770 = vmatprep.subr.mxu0 0.0
      %771 = vmatpush1.xpose.msra.mxu0 0.0
      %772 = vmatprep.subr.mxu0 0.0
      %773 = vmatpush1.xpose.msra.mxu0 0.0
      %774 = vmatprep.subr.mxu0 0.0
      %775 = vmatpush1.xpose.msra.mxu0 0.0
      %776 = vmatprep.subr.mxu0 0.0
      %777 = vmatpush1.xpose.msra.mxu0 0.0
      %778 = vmatprep.subr.mxu0 0.0
      %779 = vmatpush1.xpose.msra.mxu0 0.0
      %780 = vmatprep.subr.mxu0 0.0
      %781 = vmatpush1.xpose.msra.mxu0 0.0
      %782 = vmatprep.subr.mxu0 0.0
      %783 = vmatpush1.xpose.msra.mxu0 0.0
      %784 = vmatprep.subr.mxu0 0.0
      %785 = vmatpush1.xpose.msra.mxu0 0.0
      %786 = vmatprep.subr.mxu0 0.0
      %787 = vmatpush1.xpose.msra.mxu0 0.0
      %788 = vmatprep.subr.mxu0 0.0
      %789 = vmatpush1.xpose.msra.mxu0 0.0
      %790 = vmatprep.subr.mxu0 0.0
      %791 = vmatpush1.xpose.msra.mxu0 0.0
      %792 = vmatprep.subr.mxu0 0.0
      %793 = vmatpush1.xpose.msra.mxu0 0.0
      %794 = vmatprep.subr.mxu0 0.0
      %795 = vmatpush1.xpose.msra.mxu0 0.0
      %796 = vmatprep.subr.mxu0 0.0
      %797 = vmatpush1.xpose.msra.mxu0 0.0
      %798 = vmatprep.subr.mxu0 0.0
      %799 = vmatpush1.xpose.msra.mxu0 0.0
      %800 = vmatprep.mubr.f32.mxu0 0.0
      %801 = vmatmul.mubr.f32.gmra.mrb[0].mxu0 %v728
      %v802 = vpop.f32.mrb[0].mxu0
      %v803 = vadd.f32 0.0, %v802
      %v804 = vpop.f32.mrb[0].mxu0
      %805 = vmatprep.mubr.f32.mxu0 0.0
      %806 = vmatmul.mubr.f32.gmra.mrb[0].mxu0 %v730
      %v807 = vpop.f32.mrb[0].mxu0
      %v808 = vadd.f32 0.0, %v807
      %v809 = vpop.f32.mrb[0].mxu0
      %810 = vdwg.mxu0
      %v811 = vmul.f32 %v803, 0.35355338
      %v812 = vmul.f32 %v808, 0.35355338
      %v813 = vadd.f32 %v811, %v176
      %v814 = vadd.f32 %v812, %v177
      %v815 = vsel %vm403, %v813, -inf
      %816 = vmax.xlane.f32.xlu0 %v815
      %v817 = vpop.xlane.xlu0 %816
      %v818 = vsel %vm407, %v814, -inf
      %819 = vmax.xlane.f32.xlu0 %v818
      %v820 = vpop.xlane.xlu0 %819
      %v821 = vsub.f32 %v813, %v817
      %v822 = vsub.f32 %v814, %v820
      %v823 = vmul.f32 %v821, 1.442695
      %v824 = vpow.pop %v823
      %v825 = vmul.f32 %v822, 1.442695
      %v826 = vpow.pop %v825
      %v827 = vsel %vm403, %v824, 0.0
      %828 = vadd.xlane.f32.xlu0 %v827
      %v829 = vpop.xlane.xlu0 %828
      %v830 = vsel %vm407, %v826, 0.0
      %831 = vadd.xlane.f32.xlu0 %v830
      %v832 = vpop.xlane.xlu0 %831
      %v833 = vrcp.pop %v829
      %v834 = vrcp.pop %v832
      %v835 = vmul.f32 %v824, %v833
      %v836 = vmul.f32 %v826, %v834
      %837 = vrot.lane.b32.xlu0 %v302, 48
      %v838 = vpop.permute.xlu0 %837
      %839 = vrot.lane.b32.xlu0 %v307, 48
      %v840 = vpop.permute.xlu0 %839
      %v843 = vsel %vm403, %v835, 0
      %v846 = vsel %vm403, %v836, 0
      %v848 = vsel %vm131, %v840, 0
      %850 = vmatprep.subr.mxu0 0.0
      %851 = vmatpush1.msra.mxu0 %v838
      %852 = vmatprep.subr.mxu0 0.0
      %853 = vmatpush1.msra.mxu0 %v848
      %854 = vmatprep.subr.mxu0 0.0
      %855 = vmatpush1.msra.mxu0 0.0
      %856 = vmatprep.subr.mxu0 0.0
      %857 = vmatpush1.msra.mxu0 0.0
      %858 = vmatprep.subr.mxu0 0.0
      %859 = vmatpush1.msra.mxu0 0.0
      %860 = vmatprep.subr.mxu0 0.0
      %861 = vmatpush1.msra.mxu0 0.0
      %862 = vmatprep.subr.mxu0 0.0
      %863 = vmatpush1.msra.mxu0 0.0
      %864 = vmatprep.subr.mxu0 0.0
      %865 = vmatpush1.msra.mxu0 0.0
      %866 = vmatprep.subr.mxu0 0.0
      %867 = vmatpush1.msra.mxu0 0.0
      %868 = vmatprep.subr.mxu0 0.0
      %869 = vmatpush1.msra.mxu0 0.0
      %870 = vmatprep.subr.mxu0 0.0
      %871 = vmatpush1.msra.mxu0 0.0
      %872 = vmatprep.subr.mxu0 0.0
      %873 = vmatpush1.msra.mxu0 0.0
      %874 = vmatprep.subr.mxu0 0.0
      %875 = vmatpush1.msra.mxu0 0.0
      %876 = vmatprep.subr.mxu0 0.0
      %877 = vmatpush1.msra.mxu0 0.0
      %878 = vmatprep.subr.mxu0 0.0
      %879 = vmatpush1.msra.mxu0 0.0
      %880 = vmatprep.subr.mxu0 0.0
      %881 = vmatpush1.msra.mxu0 0.0
      %882 = vmatprep.subr.mxu0 0.0
      %883 = vmatpush1.msra.mxu0 0.0
      %884 = vmatprep.subr.mxu0 0.0
      %885 = vmatpush1.msra.mxu0 0.0
      %886 = vmatprep.subr.mxu0 0.0
      %887 = vmatpush1.msra.mxu0 0.0
      %888 = vmatprep.subr.mxu0 0.0
      %889 = vmatpush1.msra.mxu0 0.0
      %890 = vmatprep.subr.mxu0 0.0
      %891 = vmatpush1.msra.mxu0 0.0
      %892 = vmatprep.subr.mxu0 0.0
      %893 = vmatpush1.msra.mxu0 0.0
      %894 = vmatprep.subr.mxu0 0.0
      %895 = vmatpush1.msra.mxu0 0.0
      %896 = vmatprep.subr.mxu0 0.0
      %897 = vmatpush1.msra.mxu0 0.0
      %898 = vmatprep.subr.mxu0 0.0
      %899 = vmatpush1.msra.mxu0 0.0
      %900 = vmatprep.subr.mxu0 0.0
      %901 = vmatpush1.msra.mxu0 0.0
      %902 = vmatprep.subr.mxu0 0.0
      %903 = vmatpush1.msra.mxu0 0.0
      %904 = vmatprep.subr.mxu0 0.0
      %905 = vmatpush1.msra.mxu0 0.0
      %906 = vmatprep.subr.mxu0 0.0
      %907 = vmatpush1.msra.mxu0 0.0
      %908 = vmatprep.subr.mxu0 0.0
      %909 = vmatpush1.msra.mxu0 0.0
      %910 = vmatprep.subr.mxu0 0.0
      %911 = vmatpush1.msra.mxu0 0.0
      %912 = vmatprep.subr.mxu0 0.0
      %913 = vmatpush1.msra.mxu0 0.0
      %914 = vmatprep.mubr.f32.mxu0 0.0
      %915 = vmatmul.mubr.f32.gmra.mrb[0].mxu0 %v843
      %v916 = vpop.f32.mrb[0].mxu0
      %v917 = vadd.f32 0.0, %v916
      %v918 = vpop.f32.mrb[0].mxu0
      %919 = vmatprep.mubr.f32.mxu0 0.0
      %920 = vmatmul.mubr.f32.gmra.mrb[0].mxu0 %v846
      %v921 = vpop.f32.mrb[0].mxu0
      %v922 = vadd.f32 0.0, %v921
      %v923 = vpop.f32.mrb[0].mxu0
      %924 = vdwg.mxu0
      %925 = vrot.lane.b32.xlu0 %v302, 104
      %v926 = vpop.permute.xlu0 %925
      %927 = vrot.lane.b32.xlu0 %v307, 104
      %v928 = vpop.permute.xlu0 %927
      %929 = vrot.lane.b32.xlu0 %v302, 72
      %v930 = vpop.permute.xlu0 %929
      %931 = vrot.lane.b32.xlu0 %v307, 72
      %v932 = vpop.permute.xlu0 %931
      %v933 = vsel %vm53, %v926, 0
      %v935 = vsel %vm53, %v928, 0
      %v937 = vsel %vm53, %v930, 0
      %v939 = vsel %vm53, %v932, 0
      %941 = vmatprep.subr.mxu0 0.0
      %942 = vmatpush1.xpose.msra.mxu0 %v937
      %943 = vmatprep.subr.mxu0 0.0
      %944 = vmatpush1.xpose.msra.mxu0 %v939
      %945 = vmatprep.subr.mxu0 0.0
      %946 = vmatpush1.xpose.msra.mxu0 0.0
      %947 = vmatprep.subr.mxu0 0.0
      %948 = vmatpush1.xpose.msra.mxu0 0.0
      %949 = vmatprep.subr.mxu0 0.0
      %950 = vmatpush1.xpose.msra.mxu0 0.0
      %951 = vmatprep.subr.mxu0 0.0
      %952 = vmatpush1.xpose.msra.mxu0 0.0
      %953 = vmatprep.subr.mxu0 0.0
      %954 = vmatpush1.xpose.msra.mxu0 0.0
      %955 = vmatprep.subr.mxu0 0.0
      %956 = vmatpush1.xpose.msra.mxu0 0.0
      %957 = vmatprep.subr.mxu0 0.0
      %958 = vmatpush1.xpose.msra.mxu0 0.0
      %959 = vmatprep.subr.mxu0 0.0
      %960 = vmatpush1.xpose.msra.mxu0 0.0
      %961 = vmatprep.subr.mxu0 0.0
      %962 = vmatpush1.xpose.msra.mxu0 0.0
      %963 = vmatprep.subr.mxu0 0.0
      %964 = vmatpush1.xpose.msra.mxu0 0.0
      %965 = vmatprep.subr.mxu0 0.0
      %966 = vmatpush1.xpose.msra.mxu0 0.0
      %967 = vmatprep.subr.mxu0 0.0
      %968 = vmatpush1.xpose.msra.mxu0 0.0
      %969 = vmatprep.subr.mxu0 0.0
      %970 = vmatpush1.xpose.msra.mxu0 0.0
      %971 = vmatprep.subr.mxu0 0.0
      %972 = vmatpush1.xpose.msra.mxu0 0.0
      %973 = vmatprep.subr.mxu0 0.0
      %974 = vmatpush1.xpose.msra.mxu0 0.0
      %975 = vmatprep.subr.mxu0 0.0
      %976 = vmatpush1.xpose.msra.mxu0 0.0
      %977 = vmatprep.subr.mxu0 0.0
      %978 = vmatpush1.xpose.msra.mxu0 0.0
      %979 = vmatprep.subr.mxu0 0.0
      %980 = vmatpush1.xpose.msra.mxu0 0.0
      %981 = vmatprep.subr.mxu0 0.0
      %982 = vmatpush1.xpose.msra.mxu0 0.0
      %983 = vmatprep.subr.mxu0 0.0
      %984 = vmatpush1.xpose.msra.mxu0 0.0
      %985 = vmatprep.subr.mxu0 0.0
      %986 = vmatpush1.xpose.msra.mxu0 0.0
      %987 = vmatprep.subr.mxu0 0.0
      %988 = vmatpush1.xpose.msra.mxu0 0.0
      %989 = vmatprep.subr.mxu0 0.0
      %990 = vmatpush1.xpose.msra.mxu0 0.0
      %991 = vmatprep.subr.mxu0 0.0
      %992 = vmatpush1.xpose.msra.mxu0 0.0
      %993 = vmatprep.subr.mxu0 0.0
      %994 = vmatpush1.xpose.msra.mxu0 0.0
      %995 = vmatprep.subr.mxu0 0.0
      %996 = vmatpush1.xpose.msra.mxu0 0.0
      %997 = vmatprep.subr.mxu0 0.0
      %998 = vmatpush1.xpose.msra.mxu0 0.0
      %999 = vmatprep.subr.mxu0 0.0
      %1000 = vmatpush1.xpose.msra.mxu0 0.0
      %1001 = vmatprep.subr.mxu0 0.0
      %1002 = vmatpush1.xpose.msra.mxu0 0.0
      %1003 = vmatprep.subr.mxu0 0.0
      %1004 = vmatpush1.xpose.msra.mxu0 0.0
      %1005 = vmatprep.mubr.f32.mxu0 0.0
      %1006 = vmatmul.mubr.f32.gmra.mrb[0].mxu0 %v933
      %v1007 = vpop.f32.mrb[0].mxu0
      %v1008 = vadd.f32 0.0, %v1007
      %v1009 = vpop.f32.mrb[0].mxu0
      %1010 = vmatprep.mubr.f32.mxu0 0.0
      %1011 = vmatmul.mubr.f32.gmra.mrb[0].mxu0 %v935
      %v1012 = vpop.f32.mrb[0].mxu0
      %v1013 = vadd.f32 0.0, %v1012
      %v1014 = vpop.f32.mrb[0].mxu0
      %1015 = vdwg.mxu0
      %v1016 = vmul.f32 %v1008, 0.35355338
      %v1017 = vmul.f32 %v1013, 0.35355338
      %v1018 = vadd.f32 %v1016, %v176
      %v1019 = vadd.f32 %v1017, %v177
      %v1020 = vsel %vm403, %v1018, -inf
      %1021 = vmax.xlane.f32.xlu0 %v1020
      %v1022 = vpop.xlane.xlu0 %1021
      %v1023 = vsel %vm407, %v1019, -inf
      %1024 = vmax.xlane.f32.xlu0 %v1023
      %v1025 = vpop.xlane.xlu0 %1024
      %v1026 = vsub.f32 %v1018, %v1022
      %v1027 = vsub.f32 %v1019, %v1025
      %v1028 = vmul.f32 %v1026, 1.442695
      %v1029 = vpow.pop %v1028
      %v1030 = vmul.f32 %v1027, 1.442695
      %v1031 = vpow.pop %v1030
      %v1032 = vsel %vm403, %v1029, 0.0
      %1033 = vadd.xlane.f32.xlu0 %v1032
      %v1034 = vpop.xlane.xlu0 %1033
      %v1035 = vsel %vm407, %v1031, 0.0
      %1036 = vadd.xlane.f32.xlu0 %v1035
      %v1037 = vpop.xlane.xlu0 %1036
      %v1038 = vrcp.pop %v1034
      %v1039 = vrcp.pop %v1037
      %v1040 = vmul.f32 %v1029, %v1038
      %v1041 = vmul.f32 %v1031, %v1039
      %1042 = vrot.lane.b32.xlu0 %v302, 40
      %v1043 = vpop.permute.xlu0 %1042
      %1044 = vrot.lane.b32.xlu0 %v307, 40
      %v1045 = vpop.permute.xlu0 %1044
      %v1048 = vsel %vm403, %v1040, 0
      %v1051 = vsel %vm403, %v1041, 0
      %v1053 = vsel %vm131, %v1045, 0
      %1055 = vmatprep.subr.mxu0 0.0
      %1056 = vmatpush1.msra.mxu0 %v1043
      %1057 = vmatprep.subr.mxu0 0.0
      %1058 = vmatpush1.msra.mxu0 %v1053
      %1059 = vmatprep.subr.mxu0 0.0
      %1060 = vmatpush1.msra.mxu0 0.0
      %1061 = vmatprep.subr.mxu0 0.0
      %1062 = vmatpush1.msra.mxu0 0.0
      %1063 = vmatprep.subr.mxu0 0.0
      %1064 = vmatpush1.msra.mxu0 0.0
      %1065 = vmatprep.subr.mxu0 0.0
      %1066 = vmatpush1.msra.mxu0 0.0
      %1067 = vmatprep.subr.mxu0 0.0
      %1068 = vmatpush1.msra.mxu0 0.0
      %1069 = vmatprep.subr.mxu0 0.0
      %1070 = vmatpush1.msra.mxu0 0.0
      %1071 = vmatprep.subr.mxu0 0.0
      %1072 = vmatpush1.msra.mxu0 0.0
      %1073 = vmatprep.subr.mxu0 0.0
      %1074 = vmatpush1.msra.mxu0 0.0
      %1075 = vmatprep.subr.mxu0 0.0
      %1076 = vmatpush1.msra.mxu0 0.0
      %1077 = vmatprep.subr.mxu0 0.0
      %1078 = vmatpush1.msra.mxu0 0.0
      %1079 = vmatprep.subr.mxu0 0.0
      %1080 = vmatpush1.msra.mxu0 0.0
      %1081 = vmatprep.subr.mxu0 0.0
      %1082 = vmatpush1.msra.mxu0 0.0
      %1083 = vmatprep.subr.mxu0 0.0
      %1084 = vmatpush1.msra.mxu0 0.0
      %1085 = vmatprep.subr.mxu0 0.0
      %1086 = vmatpush1.msra.mxu0 0.0
      %1087 = vmatprep.subr.mxu0 0.0
      %1088 = vmatpush1.msra.mxu0 0.0
      %1089 = vmatprep.subr.mxu0 0.0
      %1090 = vmatpush1.msra.mxu0 0.0
      %1091 = vmatprep.subr.mxu0 0.0
      %1092 = vmatpush1.msra.mxu0 0.0
      %1093 = vmatprep.subr.mxu0 0.0
      %1094 = vmatpush1.msra.mxu0 0.0
      %1095 = vmatprep.subr.mxu0 0.0
      %1096 = vmatpush1.msra.mxu0 0.0
      %1097 = vmatprep.subr.mxu0 0.0
      %1098 = vmatpush1.msra.mxu0 0.0
      %1099 = vmatprep.subr.mxu0 0.0
      %1100 = vmatpush1.msra.mxu0 0.0
      %1101 = vmatprep.subr.mxu0 0.0
      %1102 = vmatpush1.msra.mxu0 0.0
      %1103 = vmatprep.subr.mxu0 0.0
      %1104 = vmatpush1.msra.mxu0 0.0
      %1105 = vmatprep.subr.mxu0 0.0
      %1106 = vmatpush1.msra.mxu0 0.0
      %1107 = vmatprep.subr.mxu0 0.0
      %1108 = vmatpush1.msra.mxu0 0.0
      %1109 = vmatprep.subr.mxu0 0.0
      %1110 = vmatpush1.msra.mxu0 0.0
      %1111 = vmatprep.subr.mxu0 0.0
      %1112 = vmatpush1.msra.mxu0 0.0
      %1113 = vmatprep.subr.mxu0 0.0
      %1114 = vmatpush1.msra.mxu0 0.0
      %1115 = vmatprep.subr.mxu0 0.0
      %1116 = vmatpush1.msra.mxu0 0.0
      %1117 = vmatprep.subr.mxu0 0.0
      %1118 = vmatpush1.msra.mxu0 0.0
      %1119 = vmatprep.mubr.f32.mxu0 0.0
      %1120 = vmatmul.mubr.f32.gmra.mrb[0].mxu0 %v1048
      %v1121 = vpop.f32.mrb[0].mxu0
      %v1122 = vadd.f32 0.0, %v1121
      %v1123 = vpop.f32.mrb[0].mxu0
      %1124 = vmatprep.mubr.f32.mxu0 0.0
      %1125 = vmatmul.mubr.f32.gmra.mrb[0].mxu0 %v1051
      %v1126 = vpop.f32.mrb[0].mxu0
      %v1127 = vadd.f32 0.0, %v1126
      %v1128 = vpop.f32.mrb[0].mxu0
      %1129 = vdwg.mxu0
      %1132 = vrot.lane.b32.xlu0 %v712, 8
      %v1133 = vpop.permute.xlu0 %1132
      %1134 = vrot.lane.b32.xlu0 %v717, 8
      %v1135 = vpop.permute.xlu0 %1134
      %1140 = vrot.lane.b32.xlu0 %v917, 16
      %v1141 = vpop.permute.xlu0 %1140
      %1142 = vrot.lane.b32.xlu0 %v922, 16
      %v1143 = vpop.permute.xlu0 %1142
      %1148 = vrot.lane.b32.xlu0 %v1122, 24
      %v1149 = vpop.permute.xlu0 %1148
      %1150 = vrot.lane.b32.xlu0 %v1127, 24
      %v1151 = vpop.permute.xlu0 %1150
      %v1154 = vsel %vm53, %v507, %v1133
      %v1155 = vsel %vm53, %v512, %v1135
      %vm1156 = vcmask 130048
      %v1157 = vsel %vm1156, %v1154, %v1141
      %v1158 = vsel %vm1156, %v1155, %v1143
      %vm1159 = vcmask 195584
      %v1160 = vsel %vm1159, %v1157, %v1149
      %v1161 = vsel %vm1159, %v1158, %v1151
      %v1162 = vlaneseq
      %v1163 = vshrl.u32 %v1162, 7
      %v1164 = vsub.s32 0, %v1163
      %v1165 = vrot.slane %v217, %v1164
      %v1167 = vsel %vm228, %v1160, 0
      %v1170 = vsel %vm228, %v1161, 0
      %1172 = vmatprep.subr.mxu0 0.0
      %1173 = vmatpush1.msra.mxu0 %v192
      %1174 = vmatprep.subr.mxu0 0.0
      %1175 = vmatpush1.msra.mxu0 %v193
      %1176 = vmatprep.subr.mxu0 0.0
      %1177 = vmatpush1.msra.mxu0 %v194
      %1178 = vmatprep.subr.mxu0 0.0
      %1179 = vmatpush1.msra.mxu0 %v195
      %1180 = vmatprep.subr.mxu0 0.0
      %1181 = vmatpush1.msra.mxu0 0.0
      %1182 = vmatprep.subr.mxu0 0.0
      %1183 = vmatpush1.msra.mxu0 0.0
      %1184 = vmatprep.subr.mxu0 0.0
      %1185 = vmatpush1.msra.mxu0 0.0
      %1186 = vmatprep.subr.mxu0 0.0
      %1187 = vmatpush1.msra.mxu0 0.0
      %1188 = vmatprep.subr.mxu0 0.0
      %1189 = vmatpush1.msra.mxu0 0.0
      %1190 = vmatprep.subr.mxu0 0.0
      %1191 = vmatpush1.msra.mxu0 0.0
      %1192 = vmatprep.subr.mxu0 0.0
      %1193 = vmatpush1.msra.mxu0 0.0
      %1194 = vmatprep.subr.mxu0 0.0
      %1195 = vmatpush1.msra.mxu0 0.0
      %1196 = vmatprep.subr.mxu0 0.0
      %1197 = vmatpush1.msra.mxu0 0.0
      %1198 = vmatprep.subr.mxu0 0.0
      %1199 = vmatpush1.msra.mxu0 0.0
      %1200 = vmatprep.subr.mxu0 0.0
      %1201 = vmatpush1.msra.mxu0 0.0
      %1202 = vmatprep.subr.mxu0 0.0
      %1203 = vmatpush1.msra.mxu0 0.0
      %1204 = vmatprep.subr.mxu0 0.0
      %1205 = vmatpush1.msra.mxu0 0.0
      %1206 = vmatprep.subr.mxu0 0.0
      %1207 = vmatpush1.msra.mxu0 0.0
      %1208 = vmatprep.subr.mxu0 0.0
      %1209 = vmatpush1.msra.mxu0 0.0
      %1210 = vmatprep.subr.mxu0 0.0
      %1211 = vmatpush1.msra.mxu0 0.0
      %1212 = vmatprep.subr.mxu0 0.0
      %1213 = vmatpush1.msra.mxu0 0.0
      %1214 = vmatprep.subr.mxu0 0.0
      %1215 = vmatpush1.msra.mxu0 0.0
      %1216 = vmatprep.subr.mxu0 0.0
      %1217 = vmatpush1.msra.mxu0 0.0
      %1218 = vmatprep.subr.mxu0 0.0
      %1219 = vmatpush1.msra.mxu0 0.0
      %1220 = vmatprep.subr.mxu0 0.0
      %1221 = vmatpush1.msra.mxu0 0.0
      %1222 = vmatprep.subr.mxu0 0.0
      %1223 = vmatpush1.msra.mxu0 0.0
      %1224 = vmatprep.subr.mxu0 0.0
      %1225 = vmatpush1.msra.mxu0 0.0
      %1226 = vmatprep.subr.mxu0 0.0
      %1227 = vmatpush1.msra.mxu0 0.0
      %1228 = vmatprep.subr.mxu0 0.0
      %1229 = vmatpush1.msra.mxu0 0.0
      %1230 = vmatprep.subr.mxu0 0.0
      %1231 = vmatpush1.msra.mxu0 0.0
      %1232 = vmatprep.subr.mxu0 0.0
      %1233 = vmatpush1.msra.mxu0 0.0
      %1234 = vmatprep.subr.mxu0 0.0
      %1235 = vmatpush1.msra.mxu0 0.0
      %1236 = vmatprep.mubr.f32.mxu0 0.0
      %1237 = vmatmul.mubr.f32.gmra.mrb[0].mxu0 %v1167
      %v1238 = vpop.f32.mrb[0].mxu0
      %v1239 = vadd.f32 %v1165, %v1238
      %v1240 = vpop.f32.mrb[0].mxu0
      %1241 = vmatprep.mubr.f32.mxu0 0.0
      %1242 = vmatmul.mubr.f32.gmra.mrb[0].mxu0 %v1170
      %v1243 = vpop.f32.mrb[0].mxu0
      %v1244 = vadd.f32 %v1165, %v1243
      %v1245 = vpop.f32.mrb[0].mxu0
      %1246 = vdwg.mxu0
      %v1247 = vadd.f32 %v184, %v1239
      %v1248 = vadd.f32 %v185, %v1244
      %v1249 = vsel %vm228, %v1247, 0.0
      %1250 = vadd.xlane.f32.xlu0 %v1249
      %v1251 = vpop.xlane.xlu0 %1250
      %vm1252 = vcmask 257024
      %v1253 = vsel %vm1252, %v1248, 0.0
      %1254 = vadd.xlane.f32.xlu0 %v1253
      %v1255 = vpop.xlane.xlu0 %1254
      %v1256 = vrcp.pop 32.0
      %v1257 = vmul.f32 %v1251, %v1256
      %v1258 = vmul.f32 %v1255, %v1256
      %v1259 = vsub.f32 %v1247, %v1257
      %v1260 = vsub.f32 %v1248, %v1258
      %v1261 = vmul.f32 %v1259, %v1259
      %v1262 = vmul.f32 %v1260, %v1260
      %v1263 = vsel %vm228, %v1261, 0.0
      %1264 = vadd.xlane.f32.xlu0 %v1263
      %v1265 = vpop.xlane.xlu0 %1264
      %v1266 = vsel %vm1252, %v1262, 0.0
      %1267 = vadd.xlane.f32.xlu0 %v1266
      %v1268 = vpop.xlane.xlu0 %1267
      %v1269 = vmul.f32 %v1265, %v1256
      %v1270 = vmul.f32 %v1268, %v1256
      %v1271 = vadd.f32 %v1269, 1e-05
      %v1272 = vadd.f32 %v1270, 1e-05
      %v1273 = vrsqrt.pop %v1271
      %v1274 = vrsqrt.pop %v1272
      %v1275 = vmul.f32 %v1259, %v1273
      %v1276 = vmul.f32 %v1260, %v1274
      %v1277 = vlaneseq
      %v1278 = vshrl.u32 %v1277, 7
      %v1279 = vsub.s32 0, %v1278
      %v1280 = vrot.slane %v218, %v1279
      %v1281 = vmul.f32 %v1275, %v1280
      %v1282 = vmul.f32 %v1276, %v1280
      %v1283 = vlaneseq
      %v1284 = vshrl.u32 %v1283, 7
      %v1285 = vsub.s32 0, %v1284
      %v1286 = vrot.slane %v219, %v1285
      %v1287 = vadd.f32 %v1281, %v1286
      %v1288 = vadd.f32 %v1282, %v1286
      %v1289 = vlaneseq
      %v1290 = vshrl.u32 %v1289, 7
      %v1291 = vsub.s32 0, %v1290
      %v1292 = vrot.slane %v220, %v1291
      %v1294 = vsel %vm228, %v1287, 0
      %v1297 = vsel %vm228, %v1288, 0
      %1299 = vmatprep.subr.mxu0 0.0
      %1300 = vmatpush1.msra.mxu0 %v196
      %1301 = vmatprep.subr.mxu0 0.0
      %1302 = vmatpush1.msra.mxu0 %v197
      %1303 = vmatprep.subr.mxu0 0.0
      %1304 = vmatpush1.msra.mxu0 %v198
      %1305 = vmatprep.subr.mxu0 0.0
      %1306 = vmatpush1.msra.mxu0 %v199
      %1307 = vmatprep.subr.mxu0 0.0
      %1308 = vmatpush1.msra.mxu0 0.0
      %1309 = vmatprep.subr.mxu0 0.0
      %1310 = vmatpush1.msra.mxu0 0.0
      %1311 = vmatprep.subr.mxu0 0.0
      %1312 = vmatpush1.msra.mxu0 0.0
      %1313 = vmatprep.subr.mxu0 0.0
      %1314 = vmatpush1.msra.mxu0 0.0
      %1315 = vmatprep.subr.mxu0 0.0
      %1316 = vmatpush1.msra.mxu0 0.0
      %1317 = vmatprep.subr.mxu0 0.0
      %1318 = vmatpush1.msra.mxu0 0.0
      %1319 = vmatprep.subr.mxu0 0.0
      %1320 = vmatpush1.msra.mxu0 0.0
      %1321 = vmatprep.subr.mxu0 0.0
      %1322 = vmatpush1.msra.mxu0 0.0
      %1323 = vmatprep.subr.mxu0 0.0
      %1324 = vmatpush1.msra.mxu0 0.0
      %1325 = vmatprep.subr.mxu0 0.0
      %1326 = vmatpush1.msra.mxu0 0.0
      %1327 = vmatprep.subr.mxu0 0.0
      %1328 = vmatpush1.msra.mxu0 0.0
      %1329 = vmatprep.subr.mxu0 0.0
      %1330 = vmatpush1.msra.mxu0 0.0
      %1331 = vmatprep.subr.mxu0 0.0
      %1332 = vmatpush1.msra.mxu0 0.0
      %1333 = vmatprep.subr.mxu0 0.0
      %1334 = vmatpush1.msra.mxu0 0.0
      %1335 = vmatprep.subr.mxu0 0.0
      %1336 = vmatpush1.msra.mxu0 0.0
      %1337 = vmatprep.subr.mxu0 0.0
      %1338 = vmatpush1.msra.mxu0 0.0
      %1339 = vmatprep.subr.mxu0 0.0
      %1340 = vmatpush1.msra.mxu0 0.0
      %1341 = vmatprep.subr.mxu0 0.0
      %1342 = vmatpush1.msra.mxu0 0.0
      %1343 = vmatprep.subr.mxu0 0.0
      %1344 = vmatpush1.msra.mxu0 0.0
      %1345 = vmatprep.subr.mxu0 0.0
      %1346 = vmatpush1.msra.mxu0 0.0
      %1347 = vmatprep.subr.mxu0 0.0
      %1348 = vmatpush1.msra.mxu0 0.0
      %1349 = vmatprep.subr.mxu0 0.0
      %1350 = vmatpush1.msra.mxu0 0.0
      %1351 = vmatprep.subr.mxu0 0.0
      %1352 = vmatpush1.msra.mxu0 0.0
      %1353 = vmatprep.subr.mxu0 0.0
      %1354 = vmatpush1.msra.mxu0 0.0
      %1355 = vmatprep.subr.mxu0 0.0
      %1356 = vmatpush1.msra.mxu0 0.0
      %1357 = vmatprep.subr.mxu0 0.0
      %1358 = vmatpush1.msra.mxu0 0.0
      %1359 = vmatprep.subr.mxu0 0.0
      %1360 = vmatpush1.msra.mxu0 0.0
      %1361 = vmatprep.subr.mxu0 0.0
      %1362 = vmatpush1.msra.mxu0 0.0
      %1363 = vmatprep.mubr.f32.mxu0 0.0
      %1364 = vmatmul.mubr.f32.gmra.mrb[0].mxu0 %v1294
      %v1365 = vpop.f32.mrb[0].mxu0
      %v1366 = vadd.f32 %v1292, %v1365
      %v1367 = vpop.f32.mrb[0].mxu0
      %1368 = vmatprep.mubr.f32.mxu0 0.0
      %1369 = vmatmul.mubr.f32.gmra.mrb[0].mxu0 %v1297
      %v1370 = vpop.f32.mrb[0].mxu0
      %v1371 = vadd.f32 %v1292, %v1370
      %v1372 = vpop.f32.mrb[0].mxu0
      %1373 = vdwg.mxu0
      %v1374 = vmax.f32 %v1366, 0.0
      %v1375 = vmax.f32 %v1371, 0.0
      %v1376 = vlaneseq
      %v1377 = vshrl.u32 %v1376, 7
      %v1378 = vsub.s32 0, %v1377
      %v1379 = vrot.slane %v221, %v1378
      %1380 = vmatprep.subr.mxu0 0.0
      %1381 = vmatpush1.msra.mxu0 %v200
      %1382 = vmatprep.subr.mxu0 0.0
      %1383 = vmatpush1.msra.mxu0 %v201
      %1384 = vmatprep.subr.mxu0 0.0
      %1385 = vmatpush1.msra.mxu0 %v202
      %1386 = vmatprep.subr.mxu0 0.0
      %1387 = vmatpush1.msra.mxu0 %v203
      %1388 = vmatprep.subr.mxu0 0.0
      %1389 = vmatpush1.msra.mxu0 %v204
      %1390 = vmatprep.subr.mxu0 0.0
      %1391 = vmatpush1.msra.mxu0 %v205
      %1392 = vmatprep.subr.mxu0 0.0
      %1393 = vmatpush1.msra.mxu0 %v206
      %1394 = vmatprep.subr.mxu0 0.0
      %1395 = vmatpush1.msra.mxu0 %v207
      %1396 = vmatprep.subr.mxu0 0.0
      %1397 = vmatpush1.msra.mxu0 %v208
      %1398 = vmatprep.subr.mxu0 0.0
      %1399 = vmatpush1.msra.mxu0 %v209
      %1400 = vmatprep.subr.mxu0 0.0
      %1401 = vmatpush1.msra.mxu0 %v210
      %1402 = vmatprep.subr.mxu0 0.0
      %1403 = vmatpush1.msra.mxu0 %v211
      %1404 = vmatprep.subr.mxu0 0.0
      %1405 = vmatpush1.msra.mxu0 %v212
      %1406 = vmatprep.subr.mxu0 0.0
      %1407 = vmatpush1.msra.mxu0 %v213
      %1408 = vmatprep.subr.mxu0 0.0
      %1409 = vmatpush1.msra.mxu0 %v214
      %1410 = vmatprep.subr.mxu0 0.0
      %1411 = vmatpush1.msra.mxu0 %v215
      %1412 = vmatprep.subr.mxu0 0.0
      %1413 = vmatpush1.msra.mxu0 0.0
      %1414 = vmatprep.subr.mxu0 0.0
      %1415 = vmatpush1.msra.mxu0 0.0
      %1416 = vmatprep.subr.mxu0 0.0
      %1417 = vmatpush1.msra.mxu0 0.0
      %1418 = vmatprep.subr.mxu0 0.0
      %1419 = vmatpush1.msra.mxu0 0.0
      %1420 = vmatprep.subr.mxu0 0.0
      %1421 = vmatpush1.msra.mxu0 0.0
      %1422 = vmatprep.subr.mxu0 0.0
      %1423 = vmatpush1.msra.mxu0 0.0
      %1424 = vmatprep.subr.mxu0 0.0
      %1425 = vmatpush1.msra.mxu0 0.0
      %1426 = vmatprep.subr.mxu0 0.0
      %1427 = vmatpush1.msra.mxu0 0.0
      %1428 = vmatprep.subr.mxu0 0.0
      %1429 = vmatpush1.msra.mxu0 0.0
      %1430 = vmatprep.subr.mxu0 0.0
      %1431 = vmatpush1.msra.mxu0 0.0
      %1432 = vmatprep.subr.mxu0 0.0
      %1433 = vmatpush1.msra.mxu0 0.0
      %1434 = vmatprep.subr.mxu0 0.0
      %1435 = vmatpush1.msra.mxu0 0.0
      %1436 = vmatprep.subr.mxu0 0.0
      %1437 = vmatpush1.msra.mxu0 0.0
      %1438 = vmatprep.subr.mxu0 0.0
      %1439 = vmatpush1.msra.mxu0 0.0
      %1440 = vmatprep.subr.mxu0 0.0
      %1441 = vmatpush1.msra.mxu0 0.0
      %1442 = vmatprep.subr.mxu0 0.0
      %1443 = vmatpush1.msra.mxu0 0.0
      %1444 = vmatprep.mubr.f32.mxu0 0.0
      %1445 = vmatmul.mubr.f32.gmra.mrb[0].mxu0 %v1374
      %v1446 = vpop.f32.mrb[0].mxu0
      %v1447 = vadd.f32 %v1379, %v1446
      %v1448 = vpop.f32.mrb[0].mxu0
      %1449 = vmatprep.mubr.f32.mxu0 0.0
      %1450 = vmatmul.mubr.f32.gmra.mrb[0].mxu0 %v1375
      %v1451 = vpop.f32.mrb[0].mxu0
      %v1452 = vadd.f32 %v1379, %v1451
      %v1453 = vpop.f32.mrb[0].mxu0
      %1454 = vdwg.mxu0
      %v1455 = vadd.f32 %v1287, %v1447
      %v1456 = vadd.f32 %v1288, %v1452
      %v1457 = vsel %vm228, %v1455, 0.0
      %1458 = vadd.xlane.f32.xlu0 %v1457
      %v1459 = vpop.xlane.xlu0 %1458
      %v1460 = vsel %vm1252, %v1456, 0.0
      %1461 = vadd.xlane.f32.xlu0 %v1460
      %v1462 = vpop.xlane.xlu0 %1461
      %v1463 = vmul.f32 %v1459, %v1256
      %v1464 = vmul.f32 %v1462, %v1256
      %v1465 = vsub.f32 %v1455, %v1463
      %v1466 = vsub.f32 %v1456, %v1464
      %v1467 = vmul.f32 %v1465, %v1465
      %v1468 = vmul.f32 %v1466, %v1466
      %v1469 = vsel %vm228, %v1467, 0.0
      %1470 = vadd.xlane.f32.xlu0 %v1469
      %v1471 = vpop.xlane.xlu0 %1470
      %v1472 = vsel %vm1252, %v1468, 0.0
      %1473 = vadd.xlane.f32.xlu0 %v1472
      %v1474 = vpop.xlane.xlu0 %1473
      %v1475 = vmul.f32 %v1471, %v1256
      %v1476 = vmul.f32 %v1474, %v1256
      %v1477 = vadd.f32 %v1475, 1e-05
      %v1478 = vadd.f32 %v1476, 1e-05
      %v1479 = vrsqrt.pop %v1477
      %v1480 = vrsqrt.pop %v1478
      %v1481 = vmul.f32 %v1465, %v1479
      %v1482 = vmul.f32 %v1466, %v1480
      %v1483 = vlaneseq
      %v1484 = vshrl.u32 %v1483, 7
      %v1485 = vsub.s32 0, %v1484
      %v1486 = vrot.slane %v222, %v1485
      %v1487 = vmul.f32 %v1481, %v1486
      %v1488 = vmul.f32 %v1482, %v1486
      %v1489 = vlaneseq
      %v1490 = vshrl.u32 %v1489, 7
      %v1491 = vsub.s32 0, %v1490
      %v1492 = vrot.slane %v223, %v1491
      %v1493 = vadd.f32 %v1487, %v1492
      %v1494 = vadd.f32 %v1488, %v1492
    $region30: #{tab_transformer_forward.1} parent=1 // loop_footer
      %s183 = sadd.s32 1, %s179
    $region31: #{tab_transformer_forward.1} parent=1 // loop_footer_branch
      %178 = sbr.rel target = $region27
    $region32: #{tab_transformer_forward.1} parent=1 // loop_exit
      _
    %v1496 = vrot.slane %v184, 4
    %1497 = vrot.lane.b32.xlu0 %v1496, 32
    %v1498 = vpop.permute.xlu0 %1497
    %1501 = vrot.lane.b32.xlu0 %v185, 64
    %v1502 = vpop.permute.xlu0 %1501
    %vm1504 = vcmask 261120
    %v1505 = vsel %vm1504, %v184, %v1498
    %vm1506 = vcmask 523264
    %v1507 = vsel %vm1506, %v1505, %v1502
    %v1508 = vld [vmem:[#allocation5] sm:$0xff]
    %v1509 = vld [vmem:[#allocation5 + $0x8] sm:$0xff]
    %v1510 = vld [vmem:[#allocation5 + $0x10] sm:$0xff]
    %v1511 = vld [vmem:[#allocation5 + $0x18] sm:$0xff]
    %v1512 = vld [vmem:[#allocation5 + $0x20] sm:$0xff]
    %v1513 = vld [vmem:[#allocation5 + $0x28] sm:$0xff]
    %v1514 = vld [vmem:[#allocation5 + $0x30] sm:$0xff]
    %v1515 = vld [vmem:[#allocation5 + $0x38] sm:$0xff]
    %v1516 = vld [vmem:[#allocation5 + $0x40] sm:$0xff]
    %v1517 = vld [vmem:[#allocation5 + $0x48] sm:$0xff]
    %v1518 = vld [vmem:[#allocation5 + $0x50] sm:$0xff]
    %v1519 = vld [vmem:[#allocation5 + $0x58] sm:$0xff]
    %v1520 = vld [vmem:[#allocation5 + $0x60] sm:$0x1]
    %v1521 = vld [vmem:[#allocation5 + $0x61] sm:$0x1]
    %v1522 = vld [vmem:[#allocation5 + $0x62] sm:$0x1]
    %v1523 = vld [vmem:[#allocation5 + $0x63] sm:$0x1]
    %v1524 = vld [vmem:[#allocation5 + $0x64] sm:$0x1]
    %v1525 = vld [vmem:[#allocation5 + $0x65] sm:$0x1]
    %v1526 = vld [vmem:[#allocation5 + $0x66] sm:$0x1]
    %v1527 = vld [vmem:[#allocation5 + $0x68] sm:$0xff]
    %v1528 = vld [vmem:[#allocation5 + $0x70] sm:$0xff]
    %v1529 = vld [vmem:[#allocation5 + $0x78] sm:$0xff]
    %v1530 = vld [vmem:[#allocation5 + $0x80] sm:$0xff]
    %v1531 = vld [vmem:[#allocation5 + $0x88] sm:$0xff]
    %v1532 = vld [vmem:[#allocation5 + $0x90] sm:$0xff]
    %v1533 = vld [vmem:[#allocation5 + $0x98] sm:$0xff]
    %v1534 = vld [vmem:[#allocation5 + $0xa0] sm:$0xff]
    %v1535 = vld [vmem:[#allocation5 + $0xa8] sm:$0xff]
    %v1536 = vld [vmem:[#allocation5 + $0xb0] sm:$0xff]
    %v1537 = vld [vmem:[#allocation5 + $0xb8] sm:$0xff]
    %v1538 = vld [vmem:[#allocation5 + $0xc0] sm:$0xff]
    %v1539 = vld [vmem:[#allocation5 + $0xc8] sm:$0xff]
    %v1540 = vld [vmem:[#allocation5 + $0xd0] sm:$0xff]
    %v1541 = vld [vmem:[#allocation5 + $0xd8] sm:$0xff]
    %v1542 = vld [vmem:[#allocation5 + $0xe0] sm:$0xff]
    %v1543 = vld [vmem:[#allocation5 + $0xe8] sm:$0xff]
    %v1544 = vld [vmem:[#allocation5 + $0xf0] sm:$0xff]
    %v1545 = vld [vmem:[#allocation5 + $0xf8] sm:$0xff]
    %v1546 = vld [vmem:[#allocation5 + $0x100] sm:$0xff]
    %v1547 = vld [vmem:[#allocation5 + $0x108] sm:$0xff]
    %v1548 = vld [vmem:[#allocation5 + $0x110] sm:$0xff]
    %v1549 = vld [vmem:[#allocation5 + $0x118] sm:$0xff]
    %v1550 = vld [vmem:[#allocation5 + $0x120] sm:$0xff]
    %v1551 = vlaneseq
    %v1552 = vshrl.u32 %v1551, 7
    %v1553 = vsub.s32 0, %v1552
    %v1554 = vrot.slane %v1520, %v1553
    %vm1555 = vcmask 785408
    %v1557 = vsel %vm1555, %v1507, 0
    %1559 = vmatprep.subr.mxu0 0.0
    %1560 = vmatpush1.msra.mxu0 %v1508
    %1561 = vmatprep.subr.mxu0 0.0
    %1562 = vmatpush1.msra.mxu0 %v1509
    %1563 = vmatprep.subr.mxu0 0.0
    %1564 = vmatpush1.msra.mxu0 %v1510
    %1565 = vmatprep.subr.mxu0 0.0
    %1566 = vmatpush1.msra.mxu0 %v1511
    %1567 = vmatprep.subr.mxu0 0.0
    %1568 = vmatpush1.msra.mxu0 %v1512
    %1569 = vmatprep.subr.mxu0 0.0
    %1570 = vmatpush1.msra.mxu0 %v1513
    %1571 = vmatprep.subr.mxu0 0.0
    %1572 = vmatpush1.msra.mxu0 %v1514
    %1573 = vmatprep.subr.mxu0 0.0
    %1574 = vmatpush1.msra.mxu0 %v1515
    %1575 = vmatprep.subr.mxu0 0.0
    %1576 = vmatpush1.msra.mxu0 %v1516
    %1577 = vmatprep.subr.mxu0 0.0
    %1578 = vmatpush1.msra.mxu0 %v1517
    %1579 = vmatprep.subr.mxu0 0.0
    %1580 = vmatpush1.msra.mxu0 %v1518
    %1581 = vmatprep.subr.mxu0 0.0
    %1582 = vmatpush1.msra.mxu0 %v1519
    %1583 = vmatprep.subr.mxu0 0.0
    %1584 = vmatpush1.msra.mxu0 0.0
    %1585 = vmatprep.subr.mxu0 0.0
    %1586 = vmatpush1.msra.mxu0 0.0
    %1587 = vmatprep.subr.mxu0 0.0
    %1588 = vmatpush1.msra.mxu0 0.0
    %1589 = vmatprep.subr.mxu0 0.0
    %1590 = vmatpush1.msra.mxu0 0.0
    %1591 = vmatprep.subr.mxu0 0.0
    %1592 = vmatpush1.msra.mxu0 0.0
    %1593 = vmatprep.subr.mxu0 0.0
    %1594 = vmatpush1.msra.mxu0 0.0
    %1595 = vmatprep.subr.mxu0 0.0
    %1596 = vmatpush1.msra.mxu0 0.0
    %1597 = vmatprep.subr.mxu0 0.0
    %1598 = vmatpush1.msra.mxu0 0.0
    %1599 = vmatprep.subr.mxu0 0.0
    %1600 = vmatpush1.msra.mxu0 0.0
    %1601 = vmatprep.subr.mxu0 0.0
    %1602 = vmatpush1.msra.mxu0 0.0
    %1603 = vmatprep.subr.mxu0 0.0
    %1604 = vmatpush1.msra.mxu0 0.0
    %1605 = vmatprep.subr.mxu0 0.0
    %1606 = vmatpush1.msra.mxu0 0.0
    %1607 = vmatprep.subr.mxu0 0.0
    %1608 = vmatpush1.msra.mxu0 0.0
    %1609 = vmatprep.subr.mxu0 0.0
    %1610 = vmatpush1.msra.mxu0 0.0
    %1611 = vmatprep.subr.mxu0 0.0
    %1612 = vmatpush1.msra.mxu0 0.0
    %1613 = vmatprep.subr.mxu0 0.0
    %1614 = vmatpush1.msra.mxu0 0.0
    %1615 = vmatprep.subr.mxu0 0.0
    %1616 = vmatpush1.msra.mxu0 0.0
    %1617 = vmatprep.subr.mxu0 0.0
    %1618 = vmatpush1.msra.mxu0 0.0
    %1619 = vmatprep.subr.mxu0 0.0
    %1620 = vmatpush1.msra.mxu0 0.0
    %1621 = vmatprep.subr.mxu0 0.0
    %1622 = vmatpush1.msra.mxu0 0.0
    %1623 = vmatprep.mubr.f32.mxu0 0.0
    %1624 = vmatmul.mubr.f32.gmra.mrb[0].mxu0 %v1557
    %v1625 = vpop.f32.mrb[0].mxu0
    %v1626 = vadd.f32 %v1554, %v1625
    %v1627 = vpop.f32.mrb[0].mxu0
    %1628 = vdwg.mxu0
    %v1629 = vlaneseq
    %v1630 = vshrl.u32 %v1629, 7
    %v1631 = vsub.s32 0, %v1630
    %v1632 = vrot.slane %v1521, %v1631
    %v1633 = vmul.f32 %v1626, %v1632
    %v1634 = vlaneseq
    %v1635 = vshrl.u32 %v1634, 7
    %v1636 = vsub.s32 0, %v1635
    %v1637 = vrot.slane %v1522, %v1636
    %v1638 = vadd.f32 %v1633, %v1637
    %v1639 = vmax.f32 %v1638, 0.0
    %v1640 = vlaneseq
    %v1641 = vshrl.u32 %v1640, 7
    %v1642 = vsub.s32 0, %v1641
    %v1643 = vrot.slane %v1523, %v1642
    %1644 = vmatprep.subr.mxu0 0.0
    %1645 = vmatpush1.msra.mxu0 %v1527
    %1646 = vmatprep.subr.mxu0 0.0
    %1647 = vmatpush1.msra.mxu0 %v1528
    %1648 = vmatprep.subr.mxu0 0.0
    %1649 = vmatpush1.msra.mxu0 %v1529
    %1650 = vmatprep.subr.mxu0 0.0
    %1651 = vmatpush1.msra.mxu0 %v1530
    %1652 = vmatprep.subr.mxu0 0.0
    %1653 = vmatpush1.msra.mxu0 %v1531
    %1654 = vmatprep.subr.mxu0 0.0
    %1655 = vmatpush1.msra.mxu0 %v1532
    %1656 = vmatprep.subr.mxu0 0.0
    %1657 = vmatpush1.msra.mxu0 %v1533
    %1658 = vmatprep.subr.mxu0 0.0
    %1659 = vmatpush1.msra.mxu0 %v1534
    %1660 = vmatprep.subr.mxu0 0.0
    %1661 = vmatpush1.msra.mxu0 %v1535
    %1662 = vmatprep.subr.mxu0 0.0
    %1663 = vmatpush1.msra.mxu0 %v1536
    %1664 = vmatprep.subr.mxu0 0.0
    %1665 = vmatpush1.msra.mxu0 %v1537
    %1666 = vmatprep.subr.mxu0 0.0
    %1667 = vmatpush1.msra.mxu0 %v1538
    %1668 = vmatprep.subr.mxu0 0.0
    %1669 = vmatpush1.msra.mxu0 %v1539
    %1670 = vmatprep.subr.mxu0 0.0
    %1671 = vmatpush1.msra.mxu0 %v1540
    %1672 = vmatprep.subr.mxu0 0.0
    %1673 = vmatpush1.msra.mxu0 %v1541
    %1674 = vmatprep.subr.mxu0 0.0
    %1675 = vmatpush1.msra.mxu0 %v1542
    %1676 = vmatprep.subr.mxu0 0.0
    %1677 = vmatpush1.msra.mxu0 0.0
    %1678 = vmatprep.subr.mxu0 0.0
    %1679 = vmatpush1.msra.mxu0 0.0
    %1680 = vmatprep.subr.mxu0 0.0
    %1681 = vmatpush1.msra.mxu0 0.0
    %1682 = vmatprep.subr.mxu0 0.0
    %1683 = vmatpush1.msra.mxu0 0.0
    %1684 = vmatprep.subr.mxu0 0.0
    %1685 = vmatpush1.msra.mxu0 0.0
    %1686 = vmatprep.subr.mxu0 0.0
    %1687 = vmatpush1.msra.mxu0 0.0
    %1688 = vmatprep.subr.mxu0 0.0
    %1689 = vmatpush1.msra.mxu0 0.0
    %1690 = vmatprep.subr.mxu0 0.0
    %1691 = vmatpush1.msra.mxu0 0.0
    %1692 = vmatprep.subr.mxu0 0.0
    %1693 = vmatpush1.msra.mxu0 0.0
    %1694 = vmatprep.subr.mxu0 0.0
    %1695 = vmatpush1.msra.mxu0 0.0
    %1696 = vmatprep.subr.mxu0 0.0
    %1697 = vmatpush1.msra.mxu0 0.0
    %1698 = vmatprep.subr.mxu0 0.0
    %1699 = vmatpush1.msra.mxu0 0.0
    %1700 = vmatprep.subr.mxu0 0.0
    %1701 = vmatpush1.msra.mxu0 0.0
    %1702 = vmatprep.subr.mxu0 0.0
    %1703 = vmatpush1.msra.mxu0 0.0
    %1704 = vmatprep.subr.mxu0 0.0
    %1705 = vmatpush1.msra.mxu0 0.0
    %1706 = vmatprep.subr.mxu0 0.0
    %1707 = vmatpush1.msra.mxu0 0.0
    %1708 = vmatprep.mubr.f32.mxu0 0.0
    %1709 = vmatmul.mubr.f32.gmra.mrb[0].mxu0 %v1639
    %v1710 = vpop.f32.mrb[0].mxu0
    %v1711 = vadd.f32 %v1643, %v1710
    %v1712 = vpop.f32.mrb[0].mxu0
    %1713 = vdwg.mxu0
    %v1714 = vlaneseq
    %v1715 = vshrl.u32 %v1714, 7
    %v1716 = vsub.s32 0, %v1715
    %v1717 = vrot.slane %v1524, %v1716
    %v1718 = vmul.f32 %v1711, %v1717
    %v1719 = vlaneseq
    %v1720 = vshrl.u32 %v1719, 7
    %v1721 = vsub.s32 0, %v1720
    %v1722 = vrot.slane %v1525, %v1721
    %v1723 = vadd.f32 %v1718, %v1722
    %v1724 = vmax.f32 %v1723, 0.0
    %v1725 = vlaneseq
    %v1726 = vshrl.u32 %v1725, 7
    %v1727 = vsub.s32 0, %v1726
    %v1728 = vrot.slane %v1526, %v1727
    %v1730 = vsel %vm1506, %v1724, 0
    %1732 = vmatprep.subr.mxu0 0.0
    %1733 = vmatpush1.msra.mxu0 %v1543
    %1734 = vmatprep.subr.mxu0 0.0
    %1735 = vmatpush1.msra.mxu0 %v1544
    %1736 = vmatprep.subr.mxu0 0.0
    %1737 = vmatpush1.msra.mxu0 %v1545
    %1738 = vmatprep.subr.mxu0 0.0
    %1739 = vmatpush1.msra.mxu0 %v1546
    %1740 = vmatprep.subr.mxu0 0.0
    %1741 = vmatpush1.msra.mxu0 %v1547
    %1742 = vmatprep.subr.mxu0 0.0
    %1743 = vmatpush1.msra.mxu0 %v1548
    %1744 = vmatprep.subr.mxu0 0.0
    %1745 = vmatpush1.msra.mxu0 %v1549
    %1746 = vmatprep.subr.mxu0 0.0
    %1747 = vmatpush1.msra.mxu0 %v1550
    %1748 = vmatprep.subr.mxu0 0.0
    %1749 = vmatpush1.msra.mxu0 0.0
    %1750 = vmatprep.subr.mxu0 0.0
    %1751 = vmatpush1.msra.mxu0 0.0
    %1752 = vmatprep.subr.mxu0 0.0
    %1753 = vmatpush1.msra.mxu0 0.0
    %1754 = vmatprep.subr.mxu0 0.0
    %1755 = vmatpush1.msra.mxu0 0.0
    %1756 = vmatprep.subr.mxu0 0.0
    %1757 = vmatpush1.msra.mxu0 0.0
    %1758 = vmatprep.subr.mxu0 0.0
    %1759 = vmatpush1.msra.mxu0 0.0
    %1760 = vmatprep.subr.mxu0 0.0
    %1761 = vmatpush1.msra.mxu0 0.0
    %1762 = vmatprep.subr.mxu0 0.0
    %1763 = vmatpush1.msra.mxu0 0.0
    %1764 = vmatprep.subr.mxu0 0.0
    %1765 = vmatpush1.msra.mxu0 0.0
    %1766 = vmatprep.subr.mxu0 0.0
    %1767 = vmatpush1.msra.mxu0 0.0
    %1768 = vmatprep.subr.mxu0 0.0
    %1769 = vmatpush1.msra.mxu0 0.0
    %1770 = vmatprep.subr.mxu0 0.0
    %1771 = vmatpush1.msra.mxu0 0.0
    %1772 = vmatprep.subr.mxu0 0.0
    %1773 = vmatpush1.msra.mxu0 0.0
    %1774 = vmatprep.subr.mxu0 0.0
    %1775 = vmatpush1.msra.mxu0 0.0
    %1776 = vmatprep.subr.mxu0 0.0
    %1777 = vmatpush1.msra.mxu0 0.0
    %1778 = vmatprep.subr.mxu0 0.0
    %1779 = vmatpush1.msra.mxu0 0.0
    %1780 = vmatprep.subr.mxu0 0.0
    %1781 = vmatpush1.msra.mxu0 0.0
    %1782 = vmatprep.subr.mxu0 0.0
    %1783 = vmatpush1.msra.mxu0 0.0
    %1784 = vmatprep.subr.mxu0 0.0
    %1785 = vmatpush1.msra.mxu0 0.0
    %1786 = vmatprep.subr.mxu0 0.0
    %1787 = vmatpush1.msra.mxu0 0.0
    %1788 = vmatprep.subr.mxu0 0.0
    %1789 = vmatpush1.msra.mxu0 0.0
    %1790 = vmatprep.subr.mxu0 0.0
    %1791 = vmatpush1.msra.mxu0 0.0
    %1792 = vmatprep.subr.mxu0 0.0
    %1793 = vmatpush1.msra.mxu0 0.0
    %1794 = vmatprep.subr.mxu0 0.0
    %1795 = vmatpush1.msra.mxu0 0.0
    %1796 = vmatprep.mubr.f32.mxu0 0.0
    %1797 = vmatmul.mubr.f32.gmra.mrb[0].mxu0 %v1730
    %v1798 = vpop.f32.mrb[0].mxu0
    %v1799 = vadd.f32 %v1728, %v1798
    %v1800 = vpop.f32.mrb[0].mxu0
    %1801 = vdwg.mxu0
    %1802 = vst [vmem:[#allocation7] sm:$0xf] %v1799
    // Predicated region
    $region33: #{tab_transformer_forward.1} parent=1 // pred_check
      _
    $region34: #{tab_transformer_forward.1} parent=1 // pred_check_branch
      %1804 = sbr.rel (0) target = $region36
    $region35: #{tab_transformer_forward.1} parent=1 // pred_region
      %s1806 = ssub.s32 64, 64
      %1807 = vsyncadd [#allocation4], %s1806
      %s1809 = sshll.u32 [#allocation7], 4
      %s1810 = int_to_ptr.vmem [resolvable:$true] %s1809
      %1812 = dma.vmem_to_hbm [thread:$0]  %s1810, 64, %s4, [#allocation4]
    $region36: #{tab_transformer_forward.1} parent=1 // pred_fallthru
      _
    // Predicated region
    $region37: #{tab_transformer_forward.1} parent=1 // pred_check
      _
    $region38: #{tab_transformer_forward.1} parent=1 // pred_check_branch
      %1814 = sbr.rel (0) target = $region40
    $region39: #{tab_transformer_forward.1} parent=1 // pred_region
      %1815 = dma.done [#allocation4], 64
    $region40: #{tab_transformer_forward.1} parent=1 // pred_fallthru
      _
    %1816 = vsyncpa [#allocation3], 1
    %1817 = vsyncpa [#allocation6], 1
    %1818 = vsyncpa [#allocation4], 1

</llo_original>
